<compile_context>
chip_gen: v5e
topology: v5e:2x2
jax: 0.10.0
libtpu: 0.0.40
codegen_flags: <defaults>
</compile_context>

<pallas_src>
import jax
import jax.numpy as jnp
from jax.experimental import pallas as pl
from jax.experimental.pallas import tpu as pltpu

# ----------------------------- small synthetic config -----------------------------
B = 2                    # batch
C_IN = 1                 # input image channels
H_IMG, W_IMG = 8, 16     # image height / width (NCHW: (B, 1, 8, 16))
C1, C2 = 8, 16           # conv channels
T_ENC = W_IMG // 2       # encoder sequence length after one 2x2 pool = 8
F_ENC = C2               # feature dim fed to encoder RNN = 16
H_ENC = 16               # encoder GRU hidden (per direction)
H_DEC = 2 * H_ENC        # decoder GRU hidden (bidirectional encoder) = 32
VOCAB = 12               # lexicon size
SOS_ID, EOS_ID = 1, 2


def _vmem(n):
    return [pl.BlockSpec(memory_space=pltpu.MemorySpace.VMEM) for _ in range(n)]


# ------------------------------ conv-as-matmul kernel ------------------------------
def _linear_relu_kernel(x_ref, w_ref, b_ref, o_ref):
    y = jnp.dot(x_ref[...], w_ref[...], preferred_element_type=jnp.float32) + b_ref[...]
    o_ref[...] = jnp.maximum(y, 0.0)


def linear_relu(x, w, b):
    M = x.shape[0]
    N = w.shape[1]
    return pl.pallas_call(
        _linear_relu_kernel,
        out_shape=jax.ShapeDtypeStruct((M, N), jnp.float32),
        in_specs=_vmem(3),
        out_specs=pl.BlockSpec(memory_space=pltpu.MemorySpace.VMEM),
    )(x, w, b)


# ------------------ fused bidirectional encoder GRU recurrence kernel ---------------
# Both directions are packed into one "wide" GRU with hidden (B, 2*H_ENC):
#   lanes [:H]  = forward direction processing time t       at grid step t
#   lanes [H:]  = backward direction processing time T-1-t  at grid step t
# The hidden-to-hidden weights are block-diagonal so one (B,2H)x(2H,2H) matmul per gate
# updates both directions.  gi (input-to-hidden + b_ih) is precomputed for all timesteps
# outside the recurrence (hoisted).  Gate weights are stacked on a leading axis (r,z,n) so
# no lane slicing inside a vreg is needed.
def _enc_rnn_kernel(gi_ref, wh_ref, bh_ref, out_ref, h_scr):
    t = pl.program_id(0)

    @pl.when(t == 0)
    def _():
        h_scr[...] = jnp.zeros_like(h_scr)

    h = h_scr[...]                                                           # (B, 2H)
    ghr = jnp.dot(h, wh_ref[0], preferred_element_type=jnp.float32) + bh_ref[0]
    ghz = jnp.dot(h, wh_ref[1], preferred_element_type=jnp.float32) + bh_ref[1]
    ghn = jnp.dot(h, wh_ref[2], preferred_element_type=jnp.float32) + bh_ref[2]
    r = jax.nn.sigmoid(gi_ref[0, 0] + ghr)
    z = jax.nn.sigmoid(gi_ref[1, 0] + ghz)
    n = jnp.tanh(gi_ref[2, 0] + r * ghn)                                     # PyTorch GRU form
    h_new = (1.0 - z) * n + z * h
    h_scr[...] = h_new
    out_ref[0] = h_new


def encoder_rnn_fused(gi, wh_blk, bh_cat):
    _, T, Bb, HH = gi.shape
    grid_spec = pltpu.PrefetchScalarGridSpec(
        num_scalar_prefetch=0,
        grid=(T,),
        in_specs=[
            pl.BlockSpec((3, 1, Bb, HH), lambda t: (0, t, 0, 0)),   # per-step gate inputs
            pl.BlockSpec((3, HH, HH), lambda t: (0, 0, 0)),         # resident hidden weights
            pl.BlockSpec((3, 1, HH), lambda t: (0, 0, 0)),          # resident hidden biases
        ],
        out_specs=pl.BlockSpec((1, Bb, HH), lambda t: (t, 0, 0)),
        scratch_shapes=[pltpu.VMEM((Bb, HH), jnp.float32)],
    )
    return pl.pallas_call(
        _enc_rnn_kernel,
        out_shape=jax.ShapeDtypeStruct((T, Bb, HH), jnp.float32),
        grid_spec=grid_spec,
        compiler_params=pltpu.CompilerParams(dimension_semantics=("arbitrary",)),
    )(gi, wh_blk, bh_cat)


# --------------------------- fused greedy attention decoder -------------------------
# One grid step = one decode step.  All weights / embedding table / encoder outputs use
# constant index_maps (DMA'd once, VMEM resident for the whole decode).  The decoder hidden
# state and the previous greedy symbol (as a one-hot row) persist in VMEM scratch, so there
# is no HBM round trip (argmax / embedding gather) on the sequential critical path.
def _dec_step_kernel(h0_ref, enc_ref, mb_ref, emb_ref, wi_ref, wh_ref, bi_ref, bh_ref,
                     wcm_ref, wcd_ref, bc_ref, wp_ref, bp_ref,
                     logp_ref, attn_ref, dech_ref, h_scr, oh_scr):
    t = pl.program_id(0)
    Bb, V = oh_scr.shape
    colf = jax.lax.broadcasted_iota(jnp.int32, (Bb, V), 1).astype(jnp.float32)

    @pl.when(t == 0)
    def _():
        h_scr[...] = h0_ref[...]
        oh_scr[...] = (colf == float(SOS_ID)).astype(jnp.float32)            # <sos> one-hot

    # embedding of previous greedy symbol via one-hot matmul (no gather needed)
    emb_x = jnp.dot(oh_scr[...], emb_ref[...], preferred_element_type=jnp.float32)   # (B, H)
    h = h_scr[...]

    # fused GRU cell (PyTorch gate order r, z, n; gate weights pre-split on dim 0)
    gir = jnp.dot(emb_x, wi_ref[0], preferred_element_type=jnp.float32) + bi_ref[0]
    giz = jnp.dot(emb_x, wi_ref[1], preferred_element_type=jnp.float32) + bi_ref[1]
    gin = jnp.dot(emb_x, wi_ref[2], preferred_element_type=jnp.float32) + bi_ref[2]
    ghr = jnp.dot(h, wh_ref[0], preferred_element_type=jnp.float32) + bh_ref[0]
    ghz = jnp.dot(h, wh_ref[1], preferred_element_type=jnp.float32) + bh_ref[1]
    ghn = jnp.dot(h, wh_ref[2], preferred_element_type=jnp.float32) + bh_ref[2]
    r = jax.nn.sigmoid(gir + ghr)
    z = jax.nn.sigmoid(giz + ghz)
    n = jnp.tanh(gin + r * ghn)
    h_new = (1.0 - z) * n + z * h                                            # (B, H_DEC)
    h_scr[...] = h_new

    # dot-product attention (q = 1): VPU broadcast-multiply + reduce; enc is time-major (T,B,H)
    enc = enc_ref[...]
    sc = jnp.sum(enc * h_new, axis=-1, keepdims=True) + mb_ref[...]          # (T, B, 1)
    sc = sc - jnp.max(sc, axis=0, keepdims=True)
    e = jnp.exp(sc)
    attn = e / jnp.sum(e, axis=0, keepdims=True)                             # (T, B, 1)
    mix = jnp.sum(attn * enc, axis=0)                                        # (B, H_DEC)

    # Luong combine (split-weight Linear([context; dec_out])) + output proj + log_softmax
    comb = jnp.tanh(jnp.dot(mix, wcm_ref[...], preferred_element_type=jnp.float32)
                    + jnp.dot(h_new, wcd_ref[...], preferred_element_type=jnp.float32)
                    + bc_ref[...])
    logits = jnp.dot(comb, wp_ref[...], preferred_element_type=jnp.float32) + bp_ref[...]
    m = jnp.max(logits, axis=-1, keepdims=True)
    ls = logits - m
    logp = ls - jnp.log(jnp.sum(jnp.exp(ls), axis=-1, keepdims=True))        # (B, VOCAB)

    # greedy argmax -> one-hot feedback for the next step (first-max tie break, all f32 ops)
    idx = jnp.min(jnp.where(logits == m, colf, float(V)), axis=-1, keepdims=True)
    oh_scr[...] = (colf == idx).astype(jnp.float32)

    logp_ref[0] = logp
    attn_ref[0] = attn
    dech_ref[...] = h_new


def decoder_fused(p, dec_h0, enc_tbd, mbias, max_len):
    T, Bb, HD = enc_tbd.shape
    V = p['emb'].shape[0]
    c2 = lambda t: (0, 0)
    c3 = lambda t: (0, 0, 0)
    grid_spec = pltpu.PrefetchScalarGridSpec(
        num_scalar_prefetch=0,
        grid=(max_len,),
        in_specs=[
            pl.BlockSpec((Bb, HD), c2),            # initial decoder hidden
            pl.BlockSpec((T, Bb, HD), c3),         # encoder outputs (time-major), resident
            pl.BlockSpec((T, Bb, 1), c3),          # additive attention mask bias
            pl.BlockSpec((V, HD), c2),             # embedding table
            pl.BlockSpec((3, HD, HD), c3),         # dec GRU W_ih (gate-stacked)
            pl.BlockSpec((3, HD, HD), c3),         # dec GRU W_hh
            pl.BlockSpec((3, 1, HD), c3),          # dec GRU b_ih
            pl.BlockSpec((3, 1, HD), c3),          # dec GRU b_hh
            pl.BlockSpec((HD, HD), c2),            # attn combine (context half)
            pl.BlockSpec((HD, HD), c2),            # attn combine (decoder-output half)
            pl.BlockSpec((1, HD), c2),             # attn combine bias
            pl.BlockSpec((HD, V), c2),             # output projection W
            pl.BlockSpec((1, V), c2),              # output projection b
        ],
        out_specs=(
            pl.BlockSpec((1, Bb, V), lambda t: (t, 0, 0)),        # per-step log-probs
            pl.BlockSpec((1, T, Bb, 1), lambda t: (t, 0, 0, 0)),  # per-step attention weights
            pl.BlockSpec((Bb, HD), c2),                           # final decoder hidden
        ),
        scratch_shapes=[pltpu.VMEM((Bb, HD), jnp.float32),        # decoder hidden state
                        pltpu.VMEM((Bb, V), jnp.float32)],        # previous-symbol one-hot
    )
    return pl.pallas_call(
        _dec_step_kernel,
        out_shape=(jax.ShapeDtypeStruct((max_len, Bb, V), jnp.float32),
                   jax.ShapeDtypeStruct((max_len, T, Bb, 1), jnp.float32),
                   jax.ShapeDtypeStruct((Bb, HD), jnp.float32)),
        grid_spec=grid_spec,
        compiler_params=pltpu.CompilerParams(dimension_semantics=("arbitrary",)),
    )(dec_h0, enc_tbd, mbias, p['emb'], p['dec_wi'], p['dec_wh'], p['dec_bi'], p['dec_bh'],
      p['attn_wm'], p['attn_wd'], p['attn_b'], p['out_w'], p['out_b'])


# --------------------------------- glue helpers ------------------------------------
def im2col3x3(x):
    """(B, H, W, C) -> (B*H*W, 9*C) patches for a 3x3 conv, padding=1 (glue)."""
    Bb, Hh, Ww, Cc = x.shape
    xp = jnp.pad(x, ((0, 0), (1, 1), (1, 1), (0, 0)))
    cols = [xp[:, kh:kh + Hh, kw:kw + Ww, :] for kh in range(3) for kw in range(3)]
    return jnp.concatenate(cols, axis=-1).reshape(Bb * Hh * Ww, 9 * Cc)


def init_params(key):
    ks = jax.random.split(key, 16)
    s = 0.1
    p = {}
    p['conv1_w'] = s * jax.random.normal(ks[0], (9 * C_IN, C1), jnp.float32)
    p['conv1_b'] = jnp.zeros((1, C1), jnp.float32)
    p['conv2_w'] = s * jax.random.normal(ks[1], (9 * C1, C2), jnp.float32)
    p['conv2_b'] = jnp.zeros((1, C2), jnp.float32)
    # encoder bidirectional GRU; gate-stacked layout (3, in, H) / (3, H, H), gate order (r,z,n)
    for d, k0 in (('f', 2), ('b', 5)):
        p[f'enc_{d}_wi'] = s * jax.random.normal(ks[k0], (3, F_ENC, H_ENC), jnp.float32)
        p[f'enc_{d}_wh'] = s * jax.random.normal(ks[k0 + 1], (3, H_ENC, H_ENC), jnp.float32)
        p[f'enc_{d}_bi'] = jnp.zeros((3, 1, H_ENC), jnp.float32)
        p[f'enc_{d}_bh'] = jnp.zeros((3, 1, H_ENC), jnp.float32)
    # decoder GRU + embedding (gate-stacked)
    p['emb'] = s * jax.random.normal(ks[8], (VOCAB, H_DEC), jnp.float32)
    p['dec_wi'] = s * jax.random.normal(ks[9], (3, H_DEC, H_DEC), jnp.float32)
    p['dec_wh'] = s * jax.random.normal(ks[10], (3, H_DEC, H_DEC), jnp.float32)
    p['dec_bi'] = jnp.zeros((3, 1, H_DEC), jnp.float32)
    p['dec_bh'] = jnp.zeros((3, 1, H_DEC), jnp.float32)
    # attention combine Linear(2*H_DEC -> H_DEC), split into context / decoder-output halves
    p['attn_wm'] = s * jax.random.normal(ks[11], (H_DEC, H_DEC), jnp.float32)
    p['attn_wd'] = s * jax.random.normal(ks[12], (H_DEC, H_DEC), jnp.float32)
    p['attn_b'] = jnp.zeros((1, H_DEC), jnp.float32)
    # output projection to vocab
    p['out_w'] = s * jax.random.normal(ks[13], (H_DEC, VOCAB), jnp.float32)
    p['out_b'] = jnp.zeros((1, VOCAB), jnp.float32)
    return p


# --------------------------------- model forward -----------------------------------
def encoder_crnn(p, x_nchw, seq_lens, mask):
    del seq_lens  # lengths are uniform in this synthetic setting (pack_padded no-op)
    x = jnp.transpose(x_nchw, (0, 2, 3, 1)).astype(jnp.float32)             # NCHW -> NHWC
    # TODO(synk): conv1 + 2x2 maxpool + conv2 + height-max kept as im2col glue + matmul
    # kernels (modest remaining overhead per review; not fused into a single window kernel).
    y = linear_relu(im2col3x3(x), p['conv1_w'], p['conv1_b']).reshape(B, H_IMG, W_IMG, C1)
    y = y.reshape(B, H_IMG // 2, 2, W_IMG // 2, 2, C1).max(axis=(2, 4))      # 2x2 max pool
    h2, w2 = H_IMG // 2, W_IMG // 2
    y = linear_relu(im2col3x3(y), p['conv2_w'], p['conv2_b']).reshape(B, h2, w2, C2)
    feats = y.max(axis=1)                                                    # (B, T_ENC, F_ENC)

    # ---- hoisted input-to-hidden matmuls: all timesteps, both directions, one einsum ----
    f_t = jnp.transpose(feats, (1, 0, 2))                                    # (T, B, F)
    f_r = f_t[::-1]                                                          # time-reversed (bwd)
    gi_f = jnp.einsum('tbf,gfh->gtbh', f_t, p['enc_f_wi']) + p['enc_f_bi'][:, None]
    gi_b = jnp.einsum('tbf,gfh->gtbh', f_r, p['enc_b_wi']) + p['enc_b_bi'][:, None]
    gi = jnp.concatenate([gi_f, gi_b], axis=-1)                              # (3, T, B, 2H)

    # ---- block-diagonal hidden weights: one matmul per gate updates both directions ----
    z0 = jnp.zeros((3, H_ENC, H_ENC), jnp.float32)
    wh_blk = jnp.concatenate(
        [jnp.concatenate([p['enc_f_wh'], z0], axis=-1),
         jnp.concatenate([z0, p['enc_b_wh']], axis=-1)], axis=1)             # (3, 2H, 2H)
    bh_cat = jnp.concatenate([p['enc_f_bh'], p['enc_b_bh']], axis=-1)        # (3, 1, 2H)

    hist = encoder_rnn_fused(gi, wh_blk, bh_cat)                             # (T, B, 2H)
    # hist[t] = [h_fwd(t), h_bwd(time T-1-t)] -> rebuild time-aligned encoder outputs
    enc_tbd = jnp.concatenate([hist[:, :, :H_ENC], hist[::-1, :, H_ENC:]], axis=-1)  # (T,B,2H)
    dec_h0 = hist[-1]                      # squeeze_hidden: concat(fwd final, bwd final) (B,2H)
    return enc_tbd, dec_h0, T_ENC


def decoder_rnn(p, enc_tbd, dec_h0, mask, max_len):
    mbias = jnp.transpose((1.0 - mask) * (-1e30))[:, :, None]                # (T, B, 1)
    logp_t, attn_t, dec_h = decoder_fused(p, dec_h0, enc_tbd, mbias, max_len)
    logps = jnp.transpose(logp_t, (1, 0, 2))                                 # (B, T_dec, V)
    attns = jnp.transpose(attn_t[..., 0], (2, 0, 1))                         # (B, T_dec, T_enc)
    syms = jnp.argmax(logps, axis=-1).astype(jnp.int32)   # == in-kernel greedy feedback symbols
    return logps, dec_h, syms, attns


def crnn_attention_forward(params, x, seq_lens, mask, teacher_forcing_ratio=0.0):
    del teacher_forcing_ratio
    enc_tbd, dec_h0, max_length = encoder_crnn(params, x, seq_lens, mask)
    # TODO(synk): teacher-forcing / target_variable path not implemented (reference call
    # uses teacher_forcing_ratio=0 -> greedy decoding only).
    return decoder_rnn(params, enc_tbd, dec_h0, mask, max_length)


# -------------------------------------- main ----------------------------------------
if __name__ == "__main__":
    key = jax.random.PRNGKey(0)
    kx, kp = jax.random.split(key)
    x = jax.random.normal(kx, (B, C_IN, H_IMG, W_IMG), jnp.float32)   # NCHW like PyTorch
    seq_lens = jnp.full((B,), T_ENC, jnp.int32)
    mask = jnp.ones((B, T_ENC), jnp.float32)
    params = init_params(kp)

    fwd = jax.jit(crnn_attention_forward)
    logp, dec_h, seqs, attns = fwd(params, x, seq_lens, mask)
    jax.block_until_ready((logp, dec_h, seqs, attns))

    assert logp.shape == (B, T_ENC, VOCAB)
    assert dec_h.shape == (B, H_DEC)
    assert seqs.shape == (B, T_ENC)
    assert attns.shape == (B, T_ENC, T_ENC)
    print("KERNEL_OK")
</pallas_src>

<mosaic_0001>
module attributes {stable_mosaic.version = 11 : i64} {
  func.func @_linear_relu_kernel(%arg0: memref<256x9xf32, #tpu.memory_space<vmem>>, %arg1: memref<9x8xf32, #tpu.memory_space<vmem>>, %arg2: memref<1x8xf32, #tpu.memory_space<vmem>>, %arg3: memref<256x8xf32, #tpu.memory_space<vmem>>) attributes {dimension_semantics = [], scalar_prefetch = 0 : i64, scratch_operands = 0 : i64, tpu.core_type = #tpu.core_type<tc>} {
    %c0 = arith.constant 0 : index
    %c0_0 = arith.constant 0 : index
    %0 = vector.load %arg0[%c0, %c0_0] : memref<256x9xf32, #tpu.memory_space<vmem>>, vector<256x9xf32>
    %c0_1 = arith.constant 0 : index
    %c0_2 = arith.constant 0 : index
    %1 = vector.load %arg1[%c0_1, %c0_2] : memref<9x8xf32, #tpu.memory_space<vmem>>, vector<9x8xf32>
    %cst = arith.constant dense<0.000000e+00> : vector<256x8xf32>
    %2 = tpu.matmul %0, %1, %cst {dimension_numbers = #tpu.dot_dimension_numbers<[1], [0], [0], [1], [0, 0, 1, 1], [], []>} : vector<256x9xf32>, vector<9x8xf32>, vector<256x8xf32> -> vector<256x8xf32>
    %c0_3 = arith.constant 0 : index
    %c0_4 = arith.constant 0 : index
    %3 = vector.load %arg2[%c0_3, %c0_4] : memref<1x8xf32, #tpu.memory_space<vmem>>, vector<1x8xf32>
    %4 = vector.broadcast %3 : vector<1x8xf32> to vector<256x8xf32>
    %5 = arith.addf %2, %4 : vector<256x8xf32>
    %cst_5 = arith.constant 0.000000e+00 : f32
    %6 = vector.broadcast %cst_5 : f32 to vector<256x8xf32>
    %7 = arith.maximumf %5, %6 : vector<256x8xf32>
    %c0_6 = arith.constant 0 : index
    %c0_7 = arith.constant 0 : index
    %8 = vector.load %arg3[%c0_6, %c0_7] : memref<256x8xf32, #tpu.memory_space<vmem>>, vector<256x8xf32>
    tpu.vector_store %arg3[%c0_6, %c0_7], %7 {strides = array<i32>} : memref<256x8xf32, #tpu.memory_space<vmem>>, vector<256x8xf32>,
    return
  }
}

module attributes {stable_mosaic.version = 11 : i64} {
  func.func @_linear_relu_kernel(%arg0: memref<64x72xf32, #tpu.memory_space<vmem>>, %arg1: memref<72x16xf32, #tpu.memory_space<vmem>>, %arg2: memref<1x16xf32, #tpu.memory_space<vmem>>, %arg3: memref<64x16xf32, #tpu.memory_space<vmem>>) attributes {dimension_semantics = [], scalar_prefetch = 0 : i64, scratch_operands = 0 : i64, tpu.core_type = #tpu.core_type<tc>} {
    %c0 = arith.constant 0 : index
    %c0_0 = arith.constant 0 : index
    %0 = vector.load %arg0[%c0, %c0_0] : memref<64x72xf32, #tpu.memory_space<vmem>>, vector<64x72xf32>
    %c0_1 = arith.constant 0 : index
    %c0_2 = arith.constant 0 : index
    %1 = vector.load %arg1[%c0_1, %c0_2] : memref<72x16xf32, #tpu.memory_space<vmem>>, vector<72x16xf32>
    %cst = arith.constant dense<0.000000e+00> : vector<64x16xf32>
    %2 = tpu.matmul %0, %1, %cst {dimension_numbers = #tpu.dot_dimension_numbers<[1], [0], [0], [1], [0, 0, 1, 1], [], []>} : vector<64x72xf32>, vector<72x16xf32>, vector<64x16xf32> -> vector<64x16xf32>
    %c0_3 = arith.constant 0 : index
    %c0_4 = arith.constant 0 : index
    %3 = vector.load %arg2[%c0_3, %c0_4] : memref<1x16xf32, #tpu.memory_space<vmem>>, vector<1x16xf32>
    %4 = vector.broadcast %3 : vector<1x16xf32> to vector<64x16xf32>
    %5 = arith.addf %2, %4 : vector<64x16xf32>
    %cst_5 = arith.constant 0.000000e+00 : f32
    %6 = vector.broadcast %cst_5 : f32 to vector<64x16xf32>
    %7 = arith.maximumf %5, %6 : vector<64x16xf32>
    %c0_6 = arith.constant 0 : index
    %c0_7 = arith.constant 0 : index
    %8 = vector.load %arg3[%c0_6, %c0_7] : memref<64x16xf32, #tpu.memory_space<vmem>>, vector<64x16xf32>
    tpu.vector_store %arg3[%c0_6, %c0_7], %7 {strides = array<i32>} : memref<64x16xf32, #tpu.memory_space<vmem>>, vector<64x16xf32>,
    return
  }
}

module attributes {stable_mosaic.version = 11 : i64} {
  func.func @_enc_rnn_kernel(%arg0: i32, %arg1: memref<3x1x2x32xf32, #tpu.memory_space<vmem>>, %arg2: memref<3x32x32xf32, #tpu.memory_space<vmem>>, %arg3: memref<3x1x32xf32, #tpu.memory_space<vmem>>, %arg4: memref<1x2x32xf32, #tpu.memory_space<vmem>>, %arg5: memref<2x32xf32, #tpu.memory_space<vmem>>) attributes {dimension_semantics = [#tpu.dimension_semantics<arbitrary>], iteration_bounds = array<i64: 8>, scalar_prefetch = 0 : i64, scratch_operands = 1 : i64, tpu.core_type = #tpu.core_type<tc>, window_params = [{transform_indices = @transform_0, window_bounds = array<i64: 3, 1, 2, 32>}, {pipeline_mode = #tpu.pipeline_mode<synchronous>, transform_indices = @transform_1, window_bounds = array<i64: 3, 32, 32>}, {pipeline_mode = #tpu.pipeline_mode<synchronous>, transform_indices = @transform_2, window_bounds = array<i64: 3, 1, 32>}, {transform_indices = @transform_3, window_bounds = array<i64: 1, 2, 32>}]} {
    %c0_i32 = arith.constant 0 : i32
    %0 = arith.cmpi eq, %arg0, %c0_i32 : i32
    %1 = arith.extui %0 : i1 to i32
    %c0_i32_0 = arith.constant 0 : i32
    %2 = arith.cmpi ne, %1, %c0_i32_0 : i32
    scf.if %2 {
      %cst_40 = arith.constant 0.000000e+00 : f32
      %55 = vector.broadcast %cst_40 : f32 to vector<2x32xf32>
      %c0_41 = arith.constant 0 : index
      %c0_42 = arith.constant 0 : index
      %56 = vector.load %arg5[%c0_41, %c0_42] : memref<2x32xf32, #tpu.memory_space<vmem>>, vector<2x32xf32>
      tpu.vector_store %arg5[%c0_41, %c0_42], %55 {strides = array<i32>} : memref<2x32xf32, #tpu.memory_space<vmem>>, vector<2x32xf32>,
    } else {
    }
    %c0 = arith.constant 0 : index
    %c0_1 = arith.constant 0 : index
    %3 = vector.load %arg5[%c0, %c0_1] : memref<2x32xf32, #tpu.memory_space<vmem>>, vector<2x32xf32>
    %c0_2 = arith.constant 0 : index
    %c0_3 = arith.constant 0 : index
    %c0_4 = arith.constant 0 : index
    %4 = vector.load %arg2[%c0_2, %c0_3, %c0_4] : memref<3x32x32xf32, #tpu.memory_space<vmem>>, vector<1x32x32xf32>
    %5 = vector.shape_cast %4 : vector<1x32x32xf32> to vector<32x32xf32>
    %cst = arith.constant dense<0.000000e+00> : vector<2x32xf32>
    %6 = tpu.matmul %3, %5, %cst {dimension_numbers = #tpu.dot_dimension_numbers<[1], [0], [0], [1], [0, 0, 1, 1], [], []>} : vector<2x32xf32>, vector<32x32xf32>, vector<2x32xf32> -> vector<2x32xf32>
    %c0_5 = arith.constant 0 : index
    %c0_6 = arith.constant 0 : index
    %c0_7 = arith.constant 0 : index
    %7 = vector.load %arg3[%c0_5, %c0_6, %c0_7] : memref<3x1x32xf32, #tpu.memory_space<vmem>>, vector<1x1x32xf32>
    %8 = vector.shape_cast %7 : vector<1x1x32xf32> to vector<1x32xf32>
    %9 = vector.broadcast %8 : vector<1x32xf32> to vector<2x32xf32>
    %10 = arith.addf %6, %9 : vector<2x32xf32>
    %c1 = arith.constant 1 : index
    %c0_8 = arith.constant 0 : index
    %c0_9 = arith.constant 0 : index
    %11 = vector.load %arg2[%c1, %c0_8, %c0_9] : memref<3x32x32xf32, #tpu.memory_space<vmem>>, vector<1x32x32xf32>
    %12 = vector.shape_cast %11 : vector<1x32x32xf32> to vector<32x32xf32>
    %cst_10 = arith.constant dense<0.000000e+00> : vector<2x32xf32>
    %13 = tpu.matmul %3, %12, %cst_10 {dimension_numbers = #tpu.dot_dimension_numbers<[1], [0], [0], [1], [0, 0, 1, 1], [], []>} : vector<2x32xf32>, vector<32x32xf32>, vector<2x32xf32> -> vector<2x32xf32>
    %c1_11 = arith.constant 1 : index
    %c0_12 = arith.constant 0 : index
    %c0_13 = arith.constant 0 : index
    %14 = vector.load %arg3[%c1_11, %c0_12, %c0_13] : memref<3x1x32xf32, #tpu.memory_space<vmem>>, vector<1x1x32xf32>
    %15 = vector.shape_cast %14 : vector<1x1x32xf32> to vector<1x32xf32>
    %16 = vector.broadcast %15 : vector<1x32xf32> to vector<2x32xf32>
    %17 = arith.addf %13, %16 : vector<2x32xf32>
    %c2 = arith.constant 2 : index
    %c0_14 = arith.constant 0 : index
    %c0_15 = arith.constant 0 : index
    %18 = vector.load %arg2[%c2, %c0_14, %c0_15] : memref<3x32x32xf32, #tpu.memory_space<vmem>>, vector<1x32x32xf32>
    %19 = vector.shape_cast %18 : vector<1x32x32xf32> to vector<32x32xf32>
    %cst_16 = arith.constant dense<0.000000e+00> : vector<2x32xf32>
    %20 = tpu.matmul %3, %19, %cst_16 {dimension_numbers = #tpu.dot_dimension_numbers<[1], [0], [0], [1], [0, 0, 1, 1], [], []>} : vector<2x32xf32>, vector<32x32xf32>, vector<2x32xf32> -> vector<2x32xf32>
    %c2_17 = arith.constant 2 : index
    %c0_18 = arith.constant 0 : index
    %c0_19 = arith.constant 0 : index
    %21 = vector.load %arg3[%c2_17, %c0_18, %c0_19] : memref<3x1x32xf32, #tpu.memory_space<vmem>>, vector<1x1x32xf32>
    %22 = vector.shape_cast %21 : vector<1x1x32xf32> to vector<1x32xf32>
    %23 = vector.broadcast %22 : vector<1x32xf32> to vector<2x32xf32>
    %24 = arith.addf %20, %23 : vector<2x32xf32>
    %c0_20 = arith.constant 0 : index
    %c0_21 = arith.constant 0 : index
    %c0_22 = arith.constant 0 : index
    %c0_23 = arith.constant 0 : index
    %25 = vector.load %arg1[%c0_20, %c0_21, %c0_22, %c0_23] : memref<3x1x2x32xf32, #tpu.memory_space<vmem>>, vector<1x1x2x32xf32>
    %26 = vector.shape_cast %25 : vector<1x1x2x32xf32> to vector<2x32xf32>
    %27 = arith.addf %26, %10 : vector<2x32xf32>
    %28 = arith.negf %27 : vector<2x32xf32>
    %29 = math.exp %28 : vector<2x32xf32>
    %cst_24 = arith.constant 1.000000e+00 : f32
    %30 = vector.broadcast %cst_24 : f32 to vector<2x32xf32>
    %31 = arith.addf %30, %29 : vector<2x32xf32>
    %32 = arith.divf %30, %31 : vector<2x32xf32>
    %c1_25 = arith.constant 1 : index
    %c0_26 = arith.constant 0 : index
    %c0_27 = arith.constant 0 : index
    %c0_28 = arith.constant 0 : index
    %33 = vector.load %arg1[%c1_25, %c0_26, %c0_27, %c0_28] : memref<3x1x2x32xf32, #tpu.memory_space<vmem>>, vector<1x1x2x32xf32>
    %34 = vector.shape_cast %33 : vector<1x1x2x32xf32> to vector<2x32xf32>
    %35 = arith.addf %34, %17 : vector<2x32xf32>
    %36 = arith.negf %35 : vector<2x32xf32>
    %37 = math.exp %36 : vector<2x32xf32>
    %cst_29 = arith.constant 1.000000e+00 : f32
    %38 = vector.broadcast %cst_29 : f32 to vector<2x32xf32>
    %39 = arith.addf %38, %37 : vector<2x32xf32>
    %40 = arith.divf %38, %39 : vector<2x32xf32>
    %c2_30 = arith.constant 2 : index
    %c0_31 = arith.constant 0 : index
    %c0_32 = arith.constant 0 : index
    %c0_33 = arith.constant 0 : index
    %41 = vector.load %arg1[%c2_30, %c0_31, %c0_32, %c0_33] : memref<3x1x2x32xf32, #tpu.memory_space<vmem>>, vector<1x1x2x32xf32>
    %42 = vector.shape_cast %41 : vector<1x1x2x32xf32> to vector<2x32xf32>
    %43 = arith.mulf %32, %24 : vector<2x32xf32>
    %44 = arith.addf %42, %43 : vector<2x32xf32>
    %45 = math.tanh %44 : vector<2x32xf32>
    %cst_34 = arith.constant 1.000000e+00 : f32
    %46 = vector.broadcast %cst_34 : f32 to vector<2x32xf32>
    %47 = arith.subf %46, %40 : vector<2x32xf32>
    %48 = arith.mulf %47, %45 : vector<2x32xf32>
    %49 = arith.mulf %40, %3 : vector<2x32xf32>
    %50 = arith.addf %48, %49 : vector<2x32xf32>
    %c0_35 = arith.constant 0 : index
    %c0_36 = arith.constant 0 : index
    %51 = vector.load %arg5[%c0_35, %c0_36] : memref<2x32xf32, #tpu.memory_space<vmem>>, vector<2x32xf32>
    tpu.vector_store %arg5[%c0_35, %c0_36], %50 {strides = array<i32>} : memref<2x32xf32, #tpu.memory_space<vmem>>, vector<2x32xf32>,
    %c0_37 = arith.constant 0 : index
    %c0_38 = arith.constant 0 : index
    %c0_39 = arith.constant 0 : index
    %52 = vector.load %arg4[%c0_37, %c0_38, %c0_39] : memref<1x2x32xf32, #tpu.memory_space<vmem>>, vector<1x2x32xf32>
    %53 = vector.shape_cast %52 : vector<1x2x32xf32> to vector<2x32xf32>
    %54 = vector.shape_cast %50 : vector<2x32xf32> to vector<1x2x32xf32>
    tpu.vector_store %arg4[%c0_37, %c0_38, %c0_39], %54 {strides = array<i32>} : memref<1x2x32xf32, #tpu.memory_space<vmem>>, vector<1x2x32xf32>,
    return
  }
  func.func @transform_0(%arg0: i32) -> (i32, i32, i32, i32) {
    %c0_i32 = arith.constant 0 : i32
    %c0_i32_0 = arith.constant 0 : i32
    %c0_i32_1 = arith.constant 0 : i32
    %c0_i32_2 = arith.constant 0 : i32
    return %c0_i32, %arg0, %c0_i32_0, %c0_i32_1 : i32, i32, i32, i32
  }
  func.func @transform_1(%arg0: i32) -> (i32, i32, i32) {
    %c0_i32 = arith.constant 0 : i32
    %c0_i32_0 = arith.constant 0 : i32
    %c0_i32_1 = arith.constant 0 : i32
    %c0_i32_2 = arith.constant 0 : i32
    return %c0_i32, %c0_i32_0, %c0_i32_1 : i32, i32, i32
  }
  func.func @transform_2(%arg0: i32) -> (i32, i32, i32) {
    %c0_i32 = arith.constant 0 : i32
    %c0_i32_0 = arith.constant 0 : i32
    %c0_i32_1 = arith.constant 0 : i32
    %c0_i32_2 = arith.constant 0 : i32
    return %c0_i32, %c0_i32_0, %c0_i32_1 : i32, i32, i32
  }
  func.func @transform_3(%arg0: i32) -> (i32, i32, i32) {
    %c0_i32 = arith.constant 0 : i32
    %c0_i32_0 = arith.constant 0 : i32
    %c0_i32_1 = arith.constant 0 : i32
    return %arg0, %c0_i32, %c0_i32_0 : i32, i32, i32
  }
}

module attributes {stable_mosaic.version = 11 : i64} {
  func.func @_dec_step_kernel(%arg0: i32, %arg1: memref<2x32xf32, #tpu.memory_space<vmem>>, %arg2: memref<8x2x32xf32, #tpu.memory_space<vmem>>, %arg3: memref<8x2x1xf32, #tpu.memory_space<vmem>>, %arg4: memref<12x32xf32, #tpu.memory_space<vmem>>, %arg5: memref<3x32x32xf32, #tpu.memory_space<vmem>>, %arg6: memref<3x32x32xf32, #tpu.memory_space<vmem>>, %arg7: memref<3x1x32xf32, #tpu.memory_space<vmem>>, %arg8: memref<3x1x32xf32, #tpu.memory_space<vmem>>, %arg9: memref<32x32xf32, #tpu.memory_space<vmem>>, %arg10: memref<32x32xf32, #tpu.memory_space<vmem>>, %arg11: memref<1x32xf32, #tpu.memory_space<vmem>>, %arg12: memref<32x12xf32, #tpu.memory_space<vmem>>, %arg13: memref<1x12xf32, #tpu.memory_space<vmem>>, %arg14: memref<1x2x12xf32, #tpu.memory_space<vmem>>, %arg15: memref<1x8x2x1xf32, #tpu.memory_space<vmem>>, %arg16: memref<2x32xf32, #tpu.memory_space<vmem>>, %arg17: memref<2x32xf32, #tpu.memory_space<vmem>>, %arg18: memref<2x12xf32, #tpu.memory_space<vmem>>) attributes {dimension_semantics = [#tpu.dimension_semantics<arbitrary>], iteration_bounds = array<i64: 8>, scalar_prefetch = 0 : i64, scratch_operands = 2 : i64, tpu.core_type = #tpu.core_type<tc>, window_params = [{pipeline_mode = #tpu.pipeline_mode<synchronous>, transform_indices = @transform_0, window_bounds = array<i64: 2, 32>}, {pipeline_mode = #tpu.pipeline_mode<synchronous>, transform_indices = @transform_1, window_bounds = array<i64: 8, 2, 32>}, {pipeline_mode = #tpu.pipeline_mode<synchronous>, transform_indices = @transform_2, window_bounds = array<i64: 8, 2, 1>}, {pipeline_mode = #tpu.pipeline_mode<synchronous>, transform_indices = @transform_3, window_bounds = array<i64: 12, 32>}, {pipeline_mode = #tpu.pipeline_mode<synchronous>, transform_indices = @transform_4, window_bounds = array<i64: 3, 32, 32>}, {pipeline_mode = #tpu.pipeline_mode<synchronous>, transform_indices = @transform_5, window_bounds = array<i64: 3, 32, 32>}, {pipeline_mode = #tpu.pipeline_mode<synchronous>, transform_indices = @transform_6, window_bounds = array<i64: 3, 1, 32>}, {pipeline_mode = #tpu.pipeline_mode<synchronous>, transform_indices = @transform_7, window_bounds = array<i64: 3, 1, 32>}, {pipeline_mode = #tpu.pipeline_mode<synchronous>, transform_indices = @transform_8, window_bounds = array<i64: 32, 32>}, {pipeline_mode = #tpu.pipeline_mode<synchronous>, transform_indices = @transform_9, window_bounds = array<i64: 32, 32>}, {pipeline_mode = #tpu.pipeline_mode<synchronous>, transform_indices = @transform_10, window_bounds = array<i64: 1, 32>}, {pipeline_mode = #tpu.pipeline_mode<synchronous>, transform_indices = @transform_11, window_bounds = array<i64: 32, 12>}, {pipeline_mode = #tpu.pipeline_mode<synchronous>, transform_indices = @transform_12, window_bounds = array<i64: 1, 12>}, {transform_indices = @transform_13, window_bounds = array<i64: 1, 2, 12>}, {transform_indices = @transform_14, window_bounds = array<i64: 1, 8, 2, 1>}, {pipeline_mode = #tpu.pipeline_mode<synchronous>, transform_indices = @transform_15, window_bounds = array<i64: 2, 32>}]} {
    %0 = tpu.iota {dimensions = array<i32: 1>} : vector<2x12xi32>
    %1 = arith.sitofp %0 : vector<2x12xi32> to vector<2x12xf32>
    %c0_i32 = arith.constant 0 : i32
    %2 = arith.cmpi eq, %arg0, %c0_i32 : i32
    %3 = arith.extui %2 : i1 to i32
    %c0_i32_0 = arith.constant 0 : i32
    %4 = arith.cmpi ne, %3, %c0_i32_0 : i32
    scf.if %4 {
      %c0_89 = arith.constant 0 : index
      %c0_90 = arith.constant 0 : index
      %134 = vector.load %arg1[%c0_89, %c0_90] : memref<2x32xf32, #tpu.memory_space<vmem>>, vector<2x32xf32>
      %c0_91 = arith.constant 0 : index
      %c0_92 = arith.constant 0 : index
      %135 = vector.load %arg17[%c0_91, %c0_92] : memref<2x32xf32, #tpu.memory_space<vmem>>, vector<2x32xf32>
      tpu.vector_store %arg17[%c0_91, %c0_92], %134 {strides = array<i32>} : memref<2x32xf32, #tpu.memory_space<vmem>>, vector<2x32xf32>,
      %cst_93 = arith.constant 1.000000e+00 : f32
      %136 = vector.broadcast %cst_93 : f32 to vector<2x12xf32>
      %137 = arith.cmpf oeq, %1, %136 : vector<2x12xf32>
      %138 = arith.extui %137 : vector<2x12xi1> to vector<2x12xi32>
      %139 = arith.sitofp %138 : vector<2x12xi32> to vector<2x12xf32>
      %c0_94 = arith.constant 0 : index
      %c0_95 = arith.constant 0 : index
      %140 = vector.load %arg18[%c0_94, %c0_95] : memref<2x12xf32, #tpu.memory_space<vmem>>, vector<2x12xf32>
      tpu.vector_store %arg18[%c0_94, %c0_95], %139 {strides = array<i32>} : memref<2x12xf32, #tpu.memory_space<vmem>>, vector<2x12xf32>,
    } else {
    }
    %c0 = arith.constant 0 : index
    %c0_1 = arith.constant 0 : index
    %5 = vector.load %arg18[%c0, %c0_1] : memref<2x12xf32, #tpu.memory_space<vmem>>, vector<2x12xf32>
    %c0_2 = arith.constant 0 : index
    %c0_3 = arith.constant 0 : index
    %6 = vector.load %arg4[%c0_2, %c0_3] : memref<12x32xf32, #tpu.memory_space<vmem>>, vector<12x32xf32>
    %cst = arith.constant dense<0.000000e+00> : vector<2x32xf32>
    %7 = tpu.matmul %5, %6, %cst {dimension_numbers = #tpu.dot_dimension_numbers<[1], [0], [0], [1], [0, 0, 1, 1], [], []>} : vector<2x12xf32>, vector<12x32xf32>, vector<2x32xf32> -> vector<2x32xf32>
    %c0_4 = arith.constant 0 : index
    %c0_5 = arith.constant 0 : index
    %8 = vector.load %arg17[%c0_4, %c0_5] : memref<2x32xf32, #tpu.memory_space<vmem>>, vector<2x32xf32>
    %c0_6 = arith.constant 0 : index
    %c0_7 = arith.constant 0 : index
    %c0_8 = arith.constant 0 : index
    %9 = vector.load %arg5[%c0_6, %c0_7, %c0_8] : memref<3x32x32xf32, #tpu.memory_space<vmem>>, vector<1x32x32xf32>
    %10 = vector.shape_cast %9 : vector<1x32x32xf32> to vector<32x32xf32>
    %cst_9 = arith.constant dense<0.000000e+00> : vector<2x32xf32>
    %11 = tpu.matmul %7, %10, %cst_9 {dimension_numbers = #tpu.dot_dimension_numbers<[1], [0], [0], [1], [0, 0, 1, 1], [], []>} : vector<2x32xf32>, vector<32x32xf32>, vector<2x32xf32> -> vector<2x32xf32>
    %c0_10 = arith.constant 0 : index
    %c0_11 = arith.constant 0 : index
    %c0_12 = arith.constant 0 : index
    %12 = vector.load %arg7[%c0_10, %c0_11, %c0_12] : memref<3x1x32xf32, #tpu.memory_space<vmem>>, vector<1x1x32xf32>
    %13 = vector.shape_cast %12 : vector<1x1x32xf32> to vector<1x32xf32>
    %14 = vector.broadcast %13 : vector<1x32xf32> to vector<2x32xf32>
    %15 = arith.addf %11, %14 : vector<2x32xf32>
    %c1 = arith.constant 1 : index
    %c0_13 = arith.constant 0 : index
    %c0_14 = arith.constant 0 : index
    %16 = vector.load %arg5[%c1, %c0_13, %c0_14] : memref<3x32x32xf32, #tpu.memory_space<vmem>>, vector<1x32x32xf32>
    %17 = vector.shape_cast %16 : vector<1x32x32xf32> to vector<32x32xf32>
    %cst_15 = arith.constant dense<0.000000e+00> : vector<2x32xf32>
    %18 = tpu.matmul %7, %17, %cst_15 {dimension_numbers = #tpu.dot_dimension_numbers<[1], [0], [0], [1], [0, 0, 1, 1], [], []>} : vector<2x32xf32>, vector<32x32xf32>, vector<2x32xf32> -> vector<2x32xf32>
    %c1_16 = arith.constant 1 : index
    %c0_17 = arith.constant 0 : index
    %c0_18 = arith.constant 0 : index
    %19 = vector.load %arg7[%c1_16, %c0_17, %c0_18] : memref<3x1x32xf32, #tpu.memory_space<vmem>>, vector<1x1x32xf32>
    %20 = vector.shape_cast %19 : vector<1x1x32xf32> to vector<1x32xf32>
    %21 = vector.broadcast %20 : vector<1x32xf32> to vector<2x32xf32>
    %22 = arith.addf %18, %21 : vector<2x32xf32>
    %c2 = arith.constant 2 : index
    %c0_19 = arith.constant 0 : index
    %c0_20 = arith.constant 0 : index
    %23 = vector.load %arg5[%c2, %c0_19, %c0_20] : memref<3x32x32xf32, #tpu.memory_space<vmem>>, vector<1x32x32xf32>
    %24 = vector.shape_cast %23 : vector<1x32x32xf32> to vector<32x32xf32>
    %cst_21 = arith.constant dense<0.000000e+00> : vector<2x32xf32>
    %25 = tpu.matmul %7, %24, %cst_21 {dimension_numbers = #tpu.dot_dimension_numbers<[1], [0], [0], [1], [0, 0, 1, 1], [], []>} : vector<2x32xf32>, vector<32x32xf32>, vector<2x32xf32> -> vector<2x32xf32>
    %c2_22 = arith.constant 2 : index
    %c0_23 = arith.constant 0 : index
    %c0_24 = arith.constant 0 : index
    %26 = vector.load %arg7[%c2_22, %c0_23, %c0_24] : memref<3x1x32xf32, #tpu.memory_space<vmem>>, vector<1x1x32xf32>
    %27 = vector.shape_cast %26 : vector<1x1x32xf32> to vector<1x32xf32>
    %28 = vector.broadcast %27 : vector<1x32xf32> to vector<2x32xf32>
    %29 = arith.addf %25, %28 : vector<2x32xf32>
    %c0_25 = arith.constant 0 : index
    %c0_26 = arith.constant 0 : index
    %c0_27 = arith.constant 0 : index
    %30 = vector.load %arg6[%c0_25, %c0_26, %c0_27] : memref<3x32x32xf32, #tpu.memory_space<vmem>>, vector<1x32x32xf32>
    %31 = vector.shape_cast %30 : vector<1x32x32xf32> to vector<32x32xf32>
    %cst_28 = arith.constant dense<0.000000e+00> : vector<2x32xf32>
    %32 = tpu.matmul %8, %31, %cst_28 {dimension_numbers = #tpu.dot_dimension_numbers<[1], [0], [0], [1], [0, 0, 1, 1], [], []>} : vector<2x32xf32>, vector<32x32xf32>, vector<2x32xf32> -> vector<2x32xf32>
    %c0_29 = arith.constant 0 : index
    %c0_30 = arith.constant 0 : index
    %c0_31 = arith.constant 0 : index
    %33 = vector.load %arg8[%c0_29, %c0_30, %c0_31] : memref<3x1x32xf32, #tpu.memory_space<vmem>>, vector<1x1x32xf32>
    %34 = vector.shape_cast %33 : vector<1x1x32xf32> to vector<1x32xf32>
    %35 = vector.broadcast %34 : vector<1x32xf32> to vector<2x32xf32>
    %36 = arith.addf %32, %35 : vector<2x32xf32>
    %c1_32 = arith.constant 1 : index
    %c0_33 = arith.constant 0 : index
    %c0_34 = arith.constant 0 : index
    %37 = vector.load %arg6[%c1_32, %c0_33, %c0_34] : memref<3x32x32xf32, #tpu.memory_space<vmem>>, vector<1x32x32xf32>
    %38 = vector.shape_cast %37 : vector<1x32x32xf32> to vector<32x32xf32>
    %cst_35 = arith.constant dense<0.000000e+00> : vector<2x32xf32>
    %39 = tpu.matmul %8, %38, %cst_35 {dimension_numbers = #tpu.dot_dimension_numbers<[1], [0], [0], [1], [0, 0, 1, 1], [], []>} : vector<2x32xf32>, vector<32x32xf32>, vector<2x32xf32> -> vector<2x32xf32>
    %c1_36 = arith.constant 1 : index
    %c0_37 = arith.constant 0 : index
    %c0_38 = arith.constant 0 : index
    %40 = vector.load %arg8[%c1_36, %c0_37, %c0_38] : memref<3x1x32xf32, #tpu.memory_space<vmem>>, vector<1x1x32xf32>
    %41 = vector.shape_cast %40 : vector<1x1x32xf32> to vector<1x32xf32>
    %42 = vector.broadcast %41 : vector<1x32xf32> to vector<2x32xf32>
    %43 = arith.addf %39, %42 : vector<2x32xf32>
    %c2_39 = arith.constant 2 : index
    %c0_40 = arith.constant 0 : index
    %c0_41 = arith.constant 0 : index
    %44 = vector.load %arg6[%c2_39, %c0_40, %c0_41] : memref<3x32x32xf32, #tpu.memory_space<vmem>>, vector<1x32x32xf32>
    %45 = vector.shape_cast %44 : vector<1x32x32xf32> to vector<32x32xf32>
    %cst_42 = arith.constant dense<0.000000e+00> : vector<2x32xf32>
    %46 = tpu.matmul %8, %45, %cst_42 {dimension_numbers = #tpu.dot_dimension_numbers<[1], [0], [0], [1], [0, 0, 1, 1], [], []>} : vector<2x32xf32>, vector<32x32xf32>, vector<2x32xf32> -> vector<2x32xf32>
    %c2_43 = arith.constant 2 : index
    %c0_44 = arith.constant 0 : index
    %c0_45 = arith.constant 0 : index
    %47 = vector.load %arg8[%c2_43, %c0_44, %c0_45] : memref<3x1x32xf32, #tpu.memory_space<vmem>>, vector<1x1x32xf32>
    %48 = vector.shape_cast %47 : vector<1x1x32xf32> to vector<1x32xf32>
    %49 = vector.broadcast %48 : vector<1x32xf32> to vector<2x32xf32>
    %50 = arith.addf %46, %49 : vector<2x32xf32>
    %51 = arith.addf %15, %36 : vector<2x32xf32>
    %52 = arith.negf %51 : vector<2x32xf32>
    %53 = math.exp %52 : vector<2x32xf32>
    %cst_46 = arith.constant 1.000000e+00 : f32
    %54 = vector.broadcast %cst_46 : f32 to vector<2x32xf32>
    %55 = arith.addf %54, %53 : vector<2x32xf32>
    %56 = arith.divf %54, %55 : vector<2x32xf32>
    %57 = arith.addf %22, %43 : vector<2x32xf32>
    %58 = arith.negf %57 : vector<2x32xf32>
    %59 = math.exp %58 : vector<2x32xf32>
    %cst_47 = arith.constant 1.000000e+00 : f32
    %60 = vector.broadcast %cst_47 : f32 to vector<2x32xf32>
    %61 = arith.addf %60, %59 : vector<2x32xf32>
    %62 = arith.divf %60, %61 : vector<2x32xf32>
    %63 = arith.mulf %56, %50 : vector<2x32xf32>
    %64 = arith.addf %29, %63 : vector<2x32xf32>
    %65 = math.tanh %64 : vector<2x32xf32>
    %cst_48 = arith.constant 1.000000e+00 : f32
    %66 = vector.broadcast %cst_48 : f32 to vector<2x32xf32>
    %67 = arith.subf %66, %62 : vector<2x32xf32>
    %68 = arith.mulf %67, %65 : vector<2x32xf32>
    %69 = arith.mulf %62, %8 : vector<2x32xf32>
    %70 = arith.addf %68, %69 : vector<2x32xf32>
    %c0_49 = arith.constant 0 : index
    %c0_50 = arith.constant 0 : index
    %71 = vector.load %arg17[%c0_49, %c0_50] : memref<2x32xf32, #tpu.memory_space<vmem>>, vector<2x32xf32>
    tpu.vector_store %arg17[%c0_49, %c0_50], %70 {strides = array<i32>} : memref<2x32xf32, #tpu.memory_space<vmem>>, vector<2x32xf32>,
    %c0_51 = arith.constant 0 : index
    %c0_52 = arith.constant 0 : index
    %c0_53 = arith.constant 0 : index
    %72 = vector.load %arg2[%c0_51, %c0_52, %c0_53] : memref<8x2x32xf32, #tpu.memory_space<vmem>>, vector<8x2x32xf32>
    %73 = vector.shape_cast %70 : vector<2x32xf32> to vector<1x2x32xf32>
    %74 = vector.broadcast %73 : vector<1x2x32xf32> to vector<8x2x32xf32>
    %75 = arith.mulf %72, %74 : vector<8x2x32xf32>
    %cst_54 = arith.constant dense<0.000000e+00> : vector<8x2xf32>
    %76 = vector.multi_reduction <add>, %75, %cst_54 [2] : vector<8x2x32xf32> to vector<8x2xf32>
    %77 = vector.shape_cast %76 : vector<8x2xf32> to vector<8x2x1xf32>
    %c0_55 = arith.constant 0 : index
    %c0_56 = arith.constant 0 : index
    %c0_57 = arith.constant 0 : index
    %78 = vector.load %arg3[%c0_55, %c0_56, %c0_57] : memref<8x2x1xf32, #tpu.memory_space<vmem>>, vector<8x2x1xf32>
    %79 = arith.addf %77, %78 : vector<8x2x1xf32>
    %cst_58 = arith.constant dense<0xFF800000> : vector<2x1xf32>
    %80 = vector.multi_reduction <maximumf>, %79, %cst_58 [0] : vector<8x2x1xf32> to vector<2x1xf32>
    %81 = vector.shape_cast %80 : vector<2x1xf32> to vector<1x2x1xf32>
    %82 = vector.broadcast %81 : vector<1x2x1xf32> to vector<8x2x1xf32>
    %83 = arith.subf %79, %82 : vector<8x2x1xf32>
    %84 = math.exp %83 : vector<8x2x1xf32>
    %cst_59 = arith.constant dense<0.000000e+00> : vector<2x1xf32>
    %85 = vector.multi_reduction <add>, %84, %cst_59 [0] : vector<8x2x1xf32> to vector<2x1xf32>
    %86 = vector.shape_cast %85 : vector<2x1xf32> to vector<1x2x1xf32>
    %87 = vector.broadcast %86 : vector<1x2x1xf32> to vector<8x2x1xf32>
    %88 = arith.divf %84, %87 : vector<8x2x1xf32>
    %89 = vector.broadcast %88 : vector<8x2x1xf32> to vector<8x2x32xf32>
    %90 = arith.mulf %89, %72 : vector<8x2x32xf32>
    %cst_60 = arith.constant dense<0.000000e+00> : vector<2x32xf32>
    %91 = vector.multi_reduction <add>, %90, %cst_60 [0] : vector<8x2x32xf32> to vector<2x32xf32>
    %c0_61 = arith.constant 0 : index
    %c0_62 = arith.constant 0 : index
    %92 = vector.load %arg9[%c0_61, %c0_62] : memref<32x32xf32, #tpu.memory_space<vmem>>, vector<32x32xf32>
    %cst_63 = arith.constant dense<0.000000e+00> : vector<2x32xf32>
    %93 = tpu.matmul %91, %92, %cst_63 {dimension_numbers = #tpu.dot_dimension_numbers<[1], [0], [0], [1], [0, 0, 1, 1], [], []>} : vector<2x32xf32>, vector<32x32xf32>, vector<2x32xf32> -> vector<2x32xf32>
    %c0_64 = arith.constant 0 : index
    %c0_65 = arith.constant 0 : index
    %94 = vector.load %arg10[%c0_64, %c0_65] : memref<32x32xf32, #tpu.memory_space<vmem>>, vector<32x32xf32>
    %cst_66 = arith.constant dense<0.000000e+00> : vector<2x32xf32>
    %95 = tpu.matmul %70, %94, %cst_66 {dimension_numbers = #tpu.dot_dimension_numbers<[1], [0], [0], [1], [0, 0, 1, 1], [], []>} : vector<2x32xf32>, vector<32x32xf32>, vector<2x32xf32> -> vector<2x32xf32>
    %96 = arith.addf %93, %95 : vector<2x32xf32>
    %c0_67 = arith.constant 0 : index
    %c0_68 = arith.constant 0 : index
    %97 = vector.load %arg11[%c0_67, %c0_68] : memref<1x32xf32, #tpu.memory_space<vmem>>, vector<1x32xf32>
    %98 = vector.broadcast %97 : vector<1x32xf32> to vector<2x32xf32>
    %99 = arith.addf %96, %98 : vector<2x32xf32>
    %100 = math.tanh %99 : vector<2x32xf32>
    %c0_69 = arith.constant 0 : index
    %c0_70 = arith.constant 0 : index
    %101 = vector.load %arg12[%c0_69, %c0_70] : memref<32x12xf32, #tpu.memory_space<vmem>>, vector<32x12xf32>
    %cst_71 = arith.constant dense<0.000000e+00> : vector<2x12xf32>
    %102 = tpu.matmul %100, %101, %cst_71 {dimension_numbers = #tpu.dot_dimension_numbers<[1], [0], [0], [1], [0, 0, 1, 1], [], []>} : vector<2x32xf32>, vector<32x12xf32>, vector<2x12xf32> -> vector<2x12xf32>
    %c0_72 = arith.constant 0 : index
    %c0_73 = arith.constant 0 : index
    %103 = vector.load %arg13[%c0_72, %c0_73] : memref<1x12xf32, #tpu.memory_space<vmem>>, vector<1x12xf32>
    %104 = vector.broadcast %103 : vector<1x12xf32> to vector<2x12xf32>
    %105 = arith.addf %102, %104 : vector<2x12xf32>
    %cst_74 = arith.constant dense<0xFF800000> : vector<2xf32>
    %106 = vector.multi_reduction <maximumf>, %105, %cst_74 [1] : vector<2x12xf32> to vector<2xf32>
    %107 = vector.shape_cast %106 : vector<2xf32> to vector<2x1xf32>
    %108 = vector.broadcast %107 : vector<2x1xf32> to vector<2x12xf32>
    %109 = arith.subf %105, %108 : vector<2x12xf32>
    %110 = math.exp %109 : vector<2x12xf32>
    %cst_75 = arith.constant dense<0.000000e+00> : vector<2xf32>
    %111 = vector.multi_reduction <add>, %110, %cst_75 [1] : vector<2x12xf32> to vector<2xf32>
    %112 = vector.shape_cast %111 : vector<2xf32> to vector<2x1xf32>
    %113 = math.log %112 : vector<2x1xf32>
    %114 = vector.broadcast %113 : vector<2x1xf32> to vector<2x12xf32>
    %115 = arith.subf %109, %114 : vector<2x12xf32>
    %116 = vector.broadcast %107 : vector<2x1xf32> to vector<2x12xf32>
    %117 = arith.cmpf oeq, %105, %116 : vector<2x12xf32>
    %cst_76 = arith.constant 1.200000e+01 : f32
    %118 = vector.broadcast %cst_76 : f32 to vector<2x12xf32>
    %119 = arith.select %117, %1, %118 : vector<2x12xi1>, vector<2x12xf32>
    %cst_77 = arith.constant dense<0x7F800000> : vector<2xf32>
    %120 = vector.multi_reduction <minimumf>, %119, %cst_77 [1] : vector<2x12xf32> to vector<2xf32>
    %121 = vector.shape_cast %120 : vector<2xf32> to vector<2x1xf32>
    %122 = vector.broadcast %121 : vector<2x1xf32> to vector<2x12xf32>
    %123 = arith.cmpf oeq, %1, %122 : vector<2x12xf32>
    %124 = arith.extui %123 : vector<2x12xi1> to vector<2x12xi32>
    %125 = arith.sitofp %124 : vector<2x12xi32> to vector<2x12xf32>
    %c0_78 = arith.constant 0 : index
    %c0_79 = arith.constant 0 : index
    %126 = vector.load %arg18[%c0_78, %c0_79] : memref<2x12xf32, #tpu.memory_space<vmem>>, vector<2x12xf32>
    tpu.vector_store %arg18[%c0_78, %c0_79], %125 {strides = array<i32>} : memref<2x12xf32, #tpu.memory_space<vmem>>, vector<2x12xf32>,
    %c0_80 = arith.constant 0 : index
    %c0_81 = arith.constant 0 : index
    %c0_82 = arith.constant 0 : index
    %127 = vector.load %arg14[%c0_80, %c0_81, %c0_82] : memref<1x2x12xf32, #tpu.memory_space<vmem>>, vector<1x2x12xf32>
    %128 = vector.shape_cast %127 : vector<1x2x12xf32> to vector<2x12xf32>
    %129 = vector.shape_cast %115 : vector<2x12xf32> to vector<1x2x12xf32>
    tpu.vector_store %arg14[%c0_80, %c0_81, %c0_82], %129 {strides = array<i32>} : memref<1x2x12xf32, #tpu.memory_space<vmem>>, vector<1x2x12xf32>,
    %c0_83 = arith.constant 0 : index
    %c0_84 = arith.constant 0 : index
    %c0_85 = arith.constant 0 : index
    %c0_86 = arith.constant 0 : index
    %130 = vector.load %arg15[%c0_83, %c0_84, %c0_85, %c0_86] : memref<1x8x2x1xf32, #tpu.memory_space<vmem>>, vector<1x8x2x1xf32>
    %131 = vector.shape_cast %130 : vector<1x8x2x1xf32> to vector<8x2x1xf32>
    %132 = vector.shape_cast %88 : vector<8x2x1xf32> to vector<1x8x2x1xf32>
    tpu.vector_store %arg15[%c0_83, %c0_84, %c0_85, %c0_86], %132 {strides = array<i32>} : memref<1x8x2x1xf32, #tpu.memory_space<vmem>>, vector<1x8x2x1xf32>,
    %c0_87 = arith.constant 0 : index
    %c0_88 = arith.constant 0 : index
    %133 = vector.load %arg16[%c0_87, %c0_88] : memref<2x32xf32, #tpu.memory_space<vmem>>, vector<2x32xf32>
    tpu.vector_store %arg16[%c0_87, %c0_88], %70 {strides = array<i32>} : memref<2x32xf32, #tpu.memory_space<vmem>>, vector<2x32xf32>,
    return
  }
  func.func @transform_0(%arg0: i32) -> (i32, i32) {
    %c0_i32 = arith.constant 0 : i32
    %c0_i32_0 = arith.constant 0 : i32
    %c0_i32_1 = arith.constant 0 : i32
    return %c0_i32, %c0_i32_0 : i32, i32
  }
  func.func @transform_1(%arg0: i32) -> (i32, i32, i32) {
    %c0_i32 = arith.constant 0 : i32
    %c0_i32_0 = arith.constant 0 : i32
    %c0_i32_1 = arith.constant 0 : i32
    %c0_i32_2 = arith.constant 0 : i32
    return %c0_i32, %c0_i32_0, %c0_i32_1 : i32, i32, i32
  }
  func.func @transform_2(%arg0: i32) -> (i32, i32, i32) {
    %c0_i32 = arith.constant 0 : i32
    %c0_i32_0 = arith.constant 0 : i32
    %c0_i32_1 = arith.constant 0 : i32
    %c0_i32_2 = arith.constant 0 : i32
    return %c0_i32, %c0_i32_0, %c0_i32_1 : i32, i32, i32
  }
  func.func @transform_3(%arg0: i32) -> (i32, i32) {
    %c0_i32 = arith.constant 0 : i32
    %c0_i32_0 = arith.constant 0 : i32
    %c0_i32_1 = arith.constant 0 : i32
    return %c0_i32, %c0_i32_0 : i32, i32
  }
  func.func @transform_4(%arg0: i32) -> (i32, i32, i32) {
    %c0_i32 = arith.constant 0 : i32
    %c0_i32_0 = arith.constant 0 : i32
    %c0_i32_1 = arith.constant 0 : i32
    %c0_i32_2 = arith.constant 0 : i32
    return %c0_i32, %c0_i32_0, %c0_i32_1 : i32, i32, i32
  }
  func.func @transform_5(%arg0: i32) -> (i32, i32, i32) {
    %c0_i32 = arith.constant 0 : i32
    %c0_i32_0 = arith.constant 0 : i32
    %c0_i32_1 = arith.constant 0 : i32
    %c0_i32_2 = arith.constant 0 : i32
    return %c0_i32, %c0_i32_0, %c0_i32_1 : i32, i32, i32
  }
  func.func @transform_6(%arg0: i32) -> (i32, i32, i32) {
    %c0_i32 = arith.constant 0 : i32
    %c0_i32_0 = arith.constant 0 : i32
    %c0_i32_1 = arith.constant 0 : i32
    %c0_i32_2 = arith.constant 0 : i32
    return %c0_i32, %c0_i32_0, %c0_i32_1 : i32, i32, i32
  }
  func.func @transform_7(%arg0: i32) -> (i32, i32, i32) {
    %c0_i32 = arith.constant 0 : i32
    %c0_i32_0 = arith.constant 0 : i32
    %c0_i32_1 = arith.constant 0 : i32
    %c0_i32_2 = arith.constant 0 : i32
    return %c0_i32, %c0_i32_0, %c0_i32_1 : i32, i32, i32
  }
  func.func @transform_8(%arg0: i32) -> (i32, i32) {
    %c0_i32 = arith.constant 0 : i32
    %c0_i32_0 = arith.constant 0 : i32
    %c0_i32_1 = arith.constant 0 : i32
    return %c0_i32, %c0_i32_0 : i32, i32
  }
  func.func @transform_9(%arg0: i32) -> (i32, i32) {
    %c0_i32 = arith.constant 0 : i32
    %c0_i32_0 = arith.constant 0 : i32
    %c0_i32_1 = arith.constant 0 : i32
    return %c0_i32, %c0_i32_0 : i32, i32
  }
  func.func @transform_10(%arg0: i32) -> (i32, i32) {
    %c0_i32 = arith.constant 0 : i32
    %c0_i32_0 = arith.constant 0 : i32
    %c0_i32_1 = arith.constant 0 : i32
    return %c0_i32, %c0_i32_0 : i32, i32
  }
  func.func @transform_11(%arg0: i32) -> (i32, i32) {
    %c0_i32 = arith.constant 0 : i32
    %c0_i32_0 = arith.constant 0 : i32
    %c0_i32_1 = arith.constant 0 : i32
    return %c0_i32, %c0_i32_0 : i32, i32
  }
  func.func @transform_12(%arg0: i32) -> (i32, i32) {
    %c0_i32 = arith.constant 0 : i32
    %c0_i32_0 = arith.constant 0 : i32
    %c0_i32_1 = arith.constant 0 : i32
    return %c0_i32, %c0_i32_0 : i32, i32
  }
  func.func @transform_13(%arg0: i32) -> (i32, i32, i32) {
    %c0_i32 = arith.constant 0 : i32
    %c0_i32_0 = arith.constant 0 : i32
    %c0_i32_1 = arith.constant 0 : i32
    return %arg0, %c0_i32, %c0_i32_0 : i32, i32, i32
  }
  func.func @transform_14(%arg0: i32) -> (i32, i32, i32, i32) {
    %c0_i32 = arith.constant 0 : i32
    %c0_i32_0 = arith.constant 0 : i32
    %c0_i32_1 = arith.constant 0 : i32
    %c0_i32_2 = arith.constant 0 : i32
    return %arg0, %c0_i32, %c0_i32_0, %c0_i32_1 : i32, i32, i32, i32
  }
  func.func @transform_15(%arg0: i32) -> (i32, i32) {
    %c0_i32 = arith.constant 0 : i32
    %c0_i32_0 = arith.constant 0 : i32
    %c0_i32_1 = arith.constant 0 : i32
    return %c0_i32, %c0_i32_0 : i32, i32
  }
}

</mosaic_0001>

<llo_original>
// kernel: crnn_attention_forward.5
$region0: #{crnn_attention_forward.5}
  #allocation0 [shape = 'u32[]', space=smem, size = 0x4, offset = 0x4, fixed_abs, tag = 'smem constant byte address 0x4 - core index']
  #allocation1 [shape = 'u32[72,128]{1,0:T(1,128)}', space=vmem, size = 0x9000, scoped, tag = 'internal scratch']
  %s0 = inlined_call_operand.vmem [shape: f32[64,72], index: 0, kind: input, shape index: {}]
  %s1 = inlined_call_operand.vmem [shape: f32[72,16], index: 1, kind: input, shape index: {}]
  %s2 = inlined_call_operand.vmem [shape: f32[1,16], index: 2, kind: input, shape index: {}]
  %s3 = inlined_call_operand.vmem [shape: f32[64,16], index: 3, kind: output, shape index: {}]
  %s4 = sld [smem:[#allocation0]]
  $region22: #{crnn_attention_forward.5} parent=0
    _
  %s6 = ssub.s32 1, %s4
  %s7 = scalar_select 0, %s6, %s4
  // Predicated region
  $region2: #{crnn_attention_forward.5} parent=0 // pred_check
    _
  $region3: #{crnn_attention_forward.5} parent=0 // pred_check_branch
    %9 = sbr.rel (0) target = $region5
  $region4: #{crnn_attention_forward.5} parent=0 // pred_region
    _
  $region5: #{crnn_attention_forward.5} parent=0 // pred_fallthru
    _
  // Predicated region
  $region6: #{crnn_attention_forward.5} parent=0 // pred_check
    _
  $region7: #{crnn_attention_forward.5} parent=0 // pred_check_branch
    %11 = sbr.rel (0) target = $region9
  $region8: #{crnn_attention_forward.5} parent=0 // pred_region
    _
  $region9: #{crnn_attention_forward.5} parent=0 // pred_fallthru
    _
  // Predicated region
  $region10: #{crnn_attention_forward.5} parent=0 // pred_check
    _
  $region11: #{crnn_attention_forward.5} parent=0 // pred_check_branch
    %13 = sbr.rel (0) target = $region13
  $region12: #{crnn_attention_forward.5} parent=0 // pred_region
    _
  $region13: #{crnn_attention_forward.5} parent=0 // pred_fallthru
    _
  %v14 = vld [vmem:[%s0] sm:$0xff]
  %v15 = vld [vmem:[%s0 + $0x8] sm:$0xff]
  %v16 = vld [vmem:[%s0 + $0x10] sm:$0xff]
  %v17 = vld [vmem:[%s0 + $0x18] sm:$0xff]
  %v18 = vld [vmem:[%s0 + $0x20] sm:$0xff]
  %v19 = vld [vmem:[%s0 + $0x28] sm:$0xff]
  %v20 = vld [vmem:[%s0 + $0x30] sm:$0xff]
  %v21 = vld [vmem:[%s0 + $0x38] sm:$0xff]
  %v22 = vld [vmem:[%s1] sm:$0xff]
  %v23 = vld [vmem:[%s1 + $0x8] sm:$0xff]
  %v24 = vld [vmem:[%s1 + $0x10] sm:$0xff]
  %v25 = vld [vmem:[%s1 + $0x18] sm:$0xff]
  %v26 = vld [vmem:[%s1 + $0x20] sm:$0xff]
  %v27 = vld [vmem:[%s1 + $0x28] sm:$0xff]
  %v28 = vld [vmem:[%s1 + $0x30] sm:$0xff]
  %v29 = vld [vmem:[%s1 + $0x38] sm:$0xff]
  %v30 = vld [vmem:[%s1 + $0x40] sm:$0xff]
  %v31 = vld [vmem:[%s2] sm:$0x1]
  %v33 = vperm.slane %v31, 0
  %vm35 = vcmask 588800
  %v37 = vsel %vm35, %v14, 0
  %v40 = vsel %vm35, %v15, 0
  %v43 = vsel %vm35, %v16, 0
  %v46 = vsel %vm35, %v17, 0
  %v49 = vsel %vm35, %v18, 0
  %v52 = vsel %vm35, %v19, 0
  %v55 = vsel %vm35, %v20, 0
  %v58 = vsel %vm35, %v21, 0
  %60 = vmatpush.msra.mxu0 0.0
  %61 = vmatpush.msra.mxu0 0.0
  %62 = vmatpush.msra.mxu0 0.0
  %63 = vmatpush.msra.mxu0 0.0
  %64 = vmatpush.msra.mxu0 0.0
  %65 = vmatpush.msra.mxu0 0.0
  %66 = vmatpush.msra.mxu0 0.0
  %67 = vmatpush.msra.mxu0 %v30
  %68 = vmatpush.msra.mxu0 %v29
  %69 = vmatpush.msra.mxu0 %v28
  %70 = vmatpush.msra.mxu0 %v27
  %71 = vmatpush.msra.mxu0 %v26
  %72 = vmatpush.msra.mxu0 %v25
  %73 = vmatpush.msra.mxu0 %v24
  %74 = vmatpush.msra.mxu0 %v23
  %75 = vmatpush.msra.mxu0 %v22
  %76 = vmatmul.f32.gmra.mxu0 %v37
  %v77 = vpop.f32.mrf.mxu0
  %v78 = vadd.f32 %v33, %v77
  %79 = vmatmul.f32.gmra.mxu0 %v40
  %v80 = vpop.f32.mrf.mxu0
  %v81 = vadd.f32 %v33, %v80
  %82 = vmatmul.f32.gmra.mxu0 %v43
  %v83 = vpop.f32.mrf.mxu0
  %v84 = vadd.f32 %v33, %v83
  %85 = vmatmul.f32.gmra.mxu0 %v46
  %v86 = vpop.f32.mrf.mxu0
  %v87 = vadd.f32 %v33, %v86
  %88 = vmatmul.f32.gmra.mxu0 %v49
  %v89 = vpop.f32.mrf.mxu0
  %v90 = vadd.f32 %v33, %v89
  %91 = vmatmul.f32.gmra.mxu0 %v52
  %v92 = vpop.f32.mrf.mxu0
  %v93 = vadd.f32 %v33, %v92
  %94 = vmatmul.f32.gmra.mxu0 %v55
  %v95 = vpop.f32.mrf.mxu0
  %v96 = vadd.f32 %v33, %v95
  %97 = vmatmul.f32.gmra.mxu0 %v58
  %v98 = vpop.f32.mrf.mxu0
  %v99 = vadd.f32 %v33, %v98
  %100 = vdwg.mxu0
  %v101 = vmax.f32 %v78, 0.0
  %v102 = vmax.f32 %v81, 0.0
  %v103 = vmax.f32 %v84, 0.0
  %v104 = vmax.f32 %v87, 0.0
  %v105 = vmax.f32 %v90, 0.0
  %v106 = vmax.f32 %v93, 0.0
  %v107 = vmax.f32 %v96, 0.0
  %v108 = vmax.f32 %v99, 0.0
  %vm109 = vcmask 130048
  %110 = vst.msk [vmem:[%s3] sm:$0xff] %vm109, %v101
  %111 = vst.msk [vmem:[%s3 + $0x8] sm:$0xff] %vm109, %v102
  %112 = vst.msk [vmem:[%s3 + $0x10] sm:$0xff] %vm109, %v103
  %113 = vst.msk [vmem:[%s3 + $0x18] sm:$0xff] %vm109, %v104
  %114 = vst.msk [vmem:[%s3 + $0x20] sm:$0xff] %vm109, %v105
  %115 = vst.msk [vmem:[%s3 + $0x28] sm:$0xff] %vm109, %v106
  %116 = vst.msk [vmem:[%s3 + $0x30] sm:$0xff] %vm109, %v107
  %117 = vst.msk [vmem:[%s3 + $0x38] sm:$0xff] %vm109, %v108
  // Predicated region
  $region14: #{crnn_attention_forward.5} parent=0 // pred_check
    _
  $region15: #{crnn_attention_forward.5} parent=0 // pred_check_branch
    %119 = sbr.rel (0) target = $region17
  $region16: #{crnn_attention_forward.5} parent=0 // pred_region
    _
  $region17: #{crnn_attention_forward.5} parent=0 // pred_fallthru
    _
  // Predicated region
  $region18: #{crnn_attention_forward.5} parent=0 // pred_check
    _
  $region19: #{crnn_attention_forward.5} parent=0 // pred_check_branch
    %121 = sbr.rel (0) target = $region21
  $region20: #{crnn_attention_forward.5} parent=0 // pred_region
    _
  $region21: #{crnn_attention_forward.5} parent=0 // pred_fallthru
    _

// kernel: crnn_attention_forward.4
$region0: #{crnn_attention_forward.4}
  #allocation0 [shape = 'u32[]', space=smem, size = 0x4, offset = 0x4, fixed_abs, tag = 'smem constant byte address 0x4 - core index']
  #allocation1 [shape = 'u32[72,128]{1,0:T(1,128)}', space=vmem, size = 0x9000, scoped, tag = 'internal scratch']
  %s0 = inlined_call_operand.vmem [shape: f32[256,9], index: 0, kind: input, shape index: {}]
  %s1 = inlined_call_operand.vmem [shape: f32[9,8], index: 1, kind: input, shape index: {}]
  %s2 = inlined_call_operand.vmem [shape: f32[1,8], index: 2, kind: input, shape index: {}]
  %s3 = inlined_call_operand.vmem [shape: f32[256,8], index: 3, kind: output, shape index: {}]
  %s4 = sld [smem:[#allocation0]]
  $region22: #{crnn_attention_forward.4} parent=0
    _
  %s6 = ssub.s32 1, %s4
  %s7 = scalar_select 0, %s6, %s4
  // Predicated region
  $region2: #{crnn_attention_forward.4} parent=0 // pred_check
    _
  $region3: #{crnn_attention_forward.4} parent=0 // pred_check_branch
    %9 = sbr.rel (0) target = $region5
  $region4: #{crnn_attention_forward.4} parent=0 // pred_region
    _
  $region5: #{crnn_attention_forward.4} parent=0 // pred_fallthru
    _
  // Predicated region
  $region6: #{crnn_attention_forward.4} parent=0 // pred_check
    _
  $region7: #{crnn_attention_forward.4} parent=0 // pred_check_branch
    %11 = sbr.rel (0) target = $region9
  $region8: #{crnn_attention_forward.4} parent=0 // pred_region
    _
  $region9: #{crnn_attention_forward.4} parent=0 // pred_fallthru
    _
  // Predicated region
  $region10: #{crnn_attention_forward.4} parent=0 // pred_check
    _
  $region11: #{crnn_attention_forward.4} parent=0 // pred_check_branch
    %13 = sbr.rel (0) target = $region13
  $region12: #{crnn_attention_forward.4} parent=0 // pred_region
    _
  $region13: #{crnn_attention_forward.4} parent=0 // pred_fallthru
    _
  %v14 = vld [vmem:[%s0] sm:$0xff]
  %v15 = vld [vmem:[%s0 + $0x8] sm:$0xff]
  %v16 = vld [vmem:[%s0 + $0x10] sm:$0xff]
  %v17 = vld [vmem:[%s0 + $0x18] sm:$0xff]
  %v18 = vld [vmem:[%s0 + $0x20] sm:$0xff]
  %v19 = vld [vmem:[%s0 + $0x28] sm:$0xff]
  %v20 = vld [vmem:[%s0 + $0x30] sm:$0xff]
  %v21 = vld [vmem:[%s0 + $0x38] sm:$0xff]
  %v22 = vld [vmem:[%s0 + $0x40] sm:$0xff]
  %v23 = vld [vmem:[%s0 + $0x48] sm:$0xff]
  %v24 = vld [vmem:[%s0 + $0x50] sm:$0xff]
  %v25 = vld [vmem:[%s0 + $0x58] sm:$0xff]
  %v26 = vld [vmem:[%s0 + $0x60] sm:$0xff]
  %v27 = vld [vmem:[%s0 + $0x68] sm:$0xff]
  %v28 = vld [vmem:[%s0 + $0x70] sm:$0xff]
  %v29 = vld [vmem:[%s0 + $0x78] sm:$0xff]
  %v30 = vld [vmem:[%s0 + $0x80] sm:$0xff]
  %v31 = vld [vmem:[%s0 + $0x88] sm:$0xff]
  %v32 = vld [vmem:[%s0 + $0x90] sm:$0xff]
  %v33 = vld [vmem:[%s0 + $0x98] sm:$0xff]
  %v34 = vld [vmem:[%s0 + $0xa0] sm:$0xff]
  %v35 = vld [vmem:[%s0 + $0xa8] sm:$0xff]
  %v36 = vld [vmem:[%s0 + $0xb0] sm:$0xff]
  %v37 = vld [vmem:[%s0 + $0xb8] sm:$0xff]
  %v38 = vld [vmem:[%s0 + $0xc0] sm:$0xff]
  %v39 = vld [vmem:[%s0 + $0xc8] sm:$0xff]
  %v40 = vld [vmem:[%s0 + $0xd0] sm:$0xff]
  %v41 = vld [vmem:[%s0 + $0xd8] sm:$0xff]
  %v42 = vld [vmem:[%s0 + $0xe0] sm:$0xff]
  %v43 = vld [vmem:[%s0 + $0xe8] sm:$0xff]
  %v44 = vld [vmem:[%s0 + $0xf0] sm:$0xff]
  %v45 = vld [vmem:[%s0 + $0xf8] sm:$0xff]
  %v46 = vld [vmem:[%s1] sm:$0xff]
  %v47 = vld [vmem:[%s1 + $0x8] sm:$0x1]
  %v48 = vld [vmem:[%s2] sm:$0x1]
  %v50 = vperm.slane %v48, 0
  %vm52 = vcmask 72704
  %v54 = vsel %vm52, %v14, 0
  %v57 = vsel %vm52, %v15, 0
  %v60 = vsel %vm52, %v16, 0
  %v63 = vsel %vm52, %v17, 0
  %v66 = vsel %vm52, %v18, 0
  %v69 = vsel %vm52, %v19, 0
  %v72 = vsel %vm52, %v20, 0
  %v75 = vsel %vm52, %v21, 0
  %v78 = vsel %vm52, %v22, 0
  %v81 = vsel %vm52, %v23, 0
  %v84 = vsel %vm52, %v24, 0
  %v87 = vsel %vm52, %v25, 0
  %v90 = vsel %vm52, %v26, 0
  %v93 = vsel %vm52, %v27, 0
  %v96 = vsel %vm52, %v28, 0
  %v99 = vsel %vm52, %v29, 0
  %v102 = vsel %vm52, %v30, 0
  %v105 = vsel %vm52, %v31, 0
  %v108 = vsel %vm52, %v32, 0
  %v111 = vsel %vm52, %v33, 0
  %v114 = vsel %vm52, %v34, 0
  %v117 = vsel %vm52, %v35, 0
  %v120 = vsel %vm52, %v36, 0
  %v123 = vsel %vm52, %v37, 0
  %v126 = vsel %vm52, %v38, 0
  %v129 = vsel %vm52, %v39, 0
  %v132 = vsel %vm52, %v40, 0
  %v135 = vsel %vm52, %v41, 0
  %v138 = vsel %vm52, %v42, 0
  %v141 = vsel %vm52, %v43, 0
  %v144 = vsel %vm52, %v44, 0
  %v147 = vsel %vm52, %v45, 0
  %vm149 = vcmask 1040384
  %v151 = vsel %vm149, %v47, 0
  %153 = vmatpush.msra.mxu0 0.0
  %154 = vmatpush.msra.mxu0 0.0
  %155 = vmatpush.msra.mxu0 0.0
  %156 = vmatpush.msra.mxu0 0.0
  %157 = vmatpush.msra.mxu0 0.0
  %158 = vmatpush.msra.mxu0 0.0
  %159 = vmatpush.msra.mxu0 0.0
  %160 = vmatpush.msra.mxu0 0.0
  %161 = vmatpush.msra.mxu0 0.0
  %162 = vmatpush.msra.mxu0 0.0
  %163 = vmatpush.msra.mxu0 0.0
  %164 = vmatpush.msra.mxu0 0.0
  %165 = vmatpush.msra.mxu0 0.0
  %166 = vmatpush.msra.mxu0 0.0
  %167 = vmatpush.msra.mxu0 %v151
  %168 = vmatpush.msra.mxu0 %v46
  %169 = vmatmul.f32.gmra.mxu0 %v54
  %v170 = vpop.f32.mrf.mxu0
  %v171 = vadd.f32 %v50, %v170
  %172 = vmatmul.f32.gmra.mxu0 %v57
  %v173 = vpop.f32.mrf.mxu0
  %v174 = vadd.f32 %v50, %v173
  %175 = vmatmul.f32.gmra.mxu0 %v60
  %v176 = vpop.f32.mrf.mxu0
  %v177 = vadd.f32 %v50, %v176
  %178 = vmatmul.f32.gmra.mxu0 %v63
  %v179 = vpop.f32.mrf.mxu0
  %v180 = vadd.f32 %v50, %v179
  %181 = vmatmul.f32.gmra.mxu0 %v66
  %v182 = vpop.f32.mrf.mxu0
  %v183 = vadd.f32 %v50, %v182
  %184 = vmatmul.f32.gmra.mxu0 %v69
  %v185 = vpop.f32.mrf.mxu0
  %v186 = vadd.f32 %v50, %v185
  %187 = vmatmul.f32.gmra.mxu0 %v72
  %v188 = vpop.f32.mrf.mxu0
  %v189 = vadd.f32 %v50, %v188
  %190 = vmatmul.f32.gmra.mxu0 %v75
  %v191 = vpop.f32.mrf.mxu0
  %v192 = vadd.f32 %v50, %v191
  %193 = vmatmul.f32.gmra.mxu0 %v78
  %v194 = vpop.f32.mrf.mxu0
  %v195 = vadd.f32 %v50, %v194
  %196 = vmatmul.f32.gmra.mxu0 %v81
  %v197 = vpop.f32.mrf.mxu0
  %v198 = vadd.f32 %v50, %v197
  %199 = vmatmul.f32.gmra.mxu0 %v84
  %v200 = vpop.f32.mrf.mxu0
  %v201 = vadd.f32 %v50, %v200
  %202 = vmatmul.f32.gmra.mxu0 %v87
  %v203 = vpop.f32.mrf.mxu0
  %v204 = vadd.f32 %v50, %v203
  %205 = vmatmul.f32.gmra.mxu0 %v90
  %v206 = vpop.f32.mrf.mxu0
  %v207 = vadd.f32 %v50, %v206
  %208 = vmatmul.f32.gmra.mxu0 %v93
  %v209 = vpop.f32.mrf.mxu0
  %v210 = vadd.f32 %v50, %v209
  %211 = vmatmul.f32.gmra.mxu0 %v96
  %v212 = vpop.f32.mrf.mxu0
  %v213 = vadd.f32 %v50, %v212
  %214 = vmatmul.f32.gmra.mxu0 %v99
  %v215 = vpop.f32.mrf.mxu0
  %v216 = vadd.f32 %v50, %v215
  %217 = vmatmul.f32.gmra.mxu0 %v102
  %v218 = vpop.f32.mrf.mxu0
  %v219 = vadd.f32 %v50, %v218
  %220 = vmatmul.f32.gmra.mxu0 %v105
  %v221 = vpop.f32.mrf.mxu0
  %v222 = vadd.f32 %v50, %v221
  %223 = vmatmul.f32.gmra.mxu0 %v108
  %v224 = vpop.f32.mrf.mxu0
  %v225 = vadd.f32 %v50, %v224
  %226 = vmatmul.f32.gmra.mxu0 %v111
  %v227 = vpop.f32.mrf.mxu0
  %v228 = vadd.f32 %v50, %v227
  %229 = vmatmul.f32.gmra.mxu0 %v114
  %v230 = vpop.f32.mrf.mxu0
  %v231 = vadd.f32 %v50, %v230
  %232 = vmatmul.f32.gmra.mxu0 %v117
  %v233 = vpop.f32.mrf.mxu0
  %v234 = vadd.f32 %v50, %v233
  %235 = vmatmul.f32.gmra.mxu0 %v120
  %v236 = vpop.f32.mrf.mxu0
  %v237 = vadd.f32 %v50, %v236
  %238 = vmatmul.f32.gmra.mxu0 %v123
  %v239 = vpop.f32.mrf.mxu0
  %v240 = vadd.f32 %v50, %v239
  %241 = vmatmul.f32.gmra.mxu0 %v126
  %v242 = vpop.f32.mrf.mxu0
  %v243 = vadd.f32 %v50, %v242
  %244 = vmatmul.f32.gmra.mxu0 %v129
  %v245 = vpop.f32.mrf.mxu0
  %v246 = vadd.f32 %v50, %v245
  %247 = vmatmul.f32.gmra.mxu0 %v132
  %v248 = vpop.f32.mrf.mxu0
  %v249 = vadd.f32 %v50, %v248
  %250 = vmatmul.f32.gmra.mxu0 %v135
  %v251 = vpop.f32.mrf.mxu0
  %v252 = vadd.f32 %v50, %v251
  %253 = vmatmul.f32.gmra.mxu0 %v138
  %v254 = vpop.f32.mrf.mxu0
  %v255 = vadd.f32 %v50, %v254
  %256 = vmatmul.f32.gmra.mxu0 %v141
  %v257 = vpop.f32.mrf.mxu0
  %v258 = vadd.f32 %v50, %v257
  %259 = vmatmul.f32.gmra.mxu0 %v144
  %v260 = vpop.f32.mrf.mxu0
  %v261 = vadd.f32 %v50, %v260
  %262 = vmatmul.f32.gmra.mxu0 %v147
  %v263 = vpop.f32.mrf.mxu0
  %v264 = vadd.f32 %v50, %v263
  %265 = vdwg.mxu0
  %v266 = vmax.f32 %v171, 0.0
  %v267 = vmax.f32 %v174, 0.0
  %v268 = vmax.f32 %v177, 0.0
  %v269 = vmax.f32 %v180, 0.0
  %v270 = vmax.f32 %v183, 0.0
  %v271 = vmax.f32 %v186, 0.0
  %v272 = vmax.f32 %v189, 0.0
  %v273 = vmax.f32 %v192, 0.0
  %v274 = vmax.f32 %v195, 0.0
  %v275 = vmax.f32 %v198, 0.0
  %v276 = vmax.f32 %v201, 0.0
  %v277 = vmax.f32 %v204, 0.0
  %v278 = vmax.f32 %v207, 0.0
  %v279 = vmax.f32 %v210, 0.0
  %v280 = vmax.f32 %v213, 0.0
  %v281 = vmax.f32 %v216, 0.0
  %v282 = vmax.f32 %v219, 0.0
  %v283 = vmax.f32 %v222, 0.0
  %v284 = vmax.f32 %v225, 0.0
  %v285 = vmax.f32 %v228, 0.0
  %v286 = vmax.f32 %v231, 0.0
  %v287 = vmax.f32 %v234, 0.0
  %v288 = vmax.f32 %v237, 0.0
  %v289 = vmax.f32 %v240, 0.0
  %v290 = vmax.f32 %v243, 0.0
  %v291 = vmax.f32 %v246, 0.0
  %v292 = vmax.f32 %v249, 0.0
  %v293 = vmax.f32 %v252, 0.0
  %v294 = vmax.f32 %v255, 0.0
  %v295 = vmax.f32 %v258, 0.0
  %v296 = vmax.f32 %v261, 0.0
  %v297 = vmax.f32 %v264, 0.0
  %vm298 = vcmask 64512
  %299 = vst.msk [vmem:[%s3] sm:$0xff] %vm298, %v266
  %300 = vst.msk [vmem:[%s3 + $0x8] sm:$0xff] %vm298, %v267
  %301 = vst.msk [vmem:[%s3 + $0x10] sm:$0xff] %vm298, %v268
  %302 = vst.msk [vmem:[%s3 + $0x18] sm:$0xff] %vm298, %v269
  %303 = vst.msk [vmem:[%s3 + $0x20] sm:$0xff] %vm298, %v270
  %304 = vst.msk [vmem:[%s3 + $0x28] sm:$0xff] %vm298, %v271
  %305 = vst.msk [vmem:[%s3 + $0x30] sm:$0xff] %vm298, %v272
  %306 = vst.msk [vmem:[%s3 + $0x38] sm:$0xff] %vm298, %v273
  %307 = vst.msk [vmem:[%s3 + $0x40] sm:$0xff] %vm298, %v274
  %308 = vst.msk [vmem:[%s3 + $0x48] sm:$0xff] %vm298, %v275
  %309 = vst.msk [vmem:[%s3 + $0x50] sm:$0xff] %vm298, %v276
  %310 = vst.msk [vmem:[%s3 + $0x58] sm:$0xff] %vm298, %v277
  %311 = vst.msk [vmem:[%s3 + $0x60] sm:$0xff] %vm298, %v278
  %312 = vst.msk [vmem:[%s3 + $0x68] sm:$0xff] %vm298, %v279
  %313 = vst.msk [vmem:[%s3 + $0x70] sm:$0xff] %vm298, %v280
  %314 = vst.msk [vmem:[%s3 + $0x78] sm:$0xff] %vm298, %v281
  %315 = vst.msk [vmem:[%s3 + $0x80] sm:$0xff] %vm298, %v282
  %316 = vst.msk [vmem:[%s3 + $0x88] sm:$0xff] %vm298, %v283
  %317 = vst.msk [vmem:[%s3 + $0x90] sm:$0xff] %vm298, %v284
  %318 = vst.msk [vmem:[%s3 + $0x98] sm:$0xff] %vm298, %v285
  %319 = vst.msk [vmem:[%s3 + $0xa0] sm:$0xff] %vm298, %v286
  %320 = vst.msk [vmem:[%s3 + $0xa8] sm:$0xff] %vm298, %v287
  %321 = vst.msk [vmem:[%s3 + $0xb0] sm:$0xff] %vm298, %v288
  %322 = vst.msk [vmem:[%s3 + $0xb8] sm:$0xff] %vm298, %v289
  %323 = vst.msk [vmem:[%s3 + $0xc0] sm:$0xff] %vm298, %v290
  %324 = vst.msk [vmem:[%s3 + $0xc8] sm:$0xff] %vm298, %v291
  %325 = vst.msk [vmem:[%s3 + $0xd0] sm:$0xff] %vm298, %v292
  %326 = vst.msk [vmem:[%s3 + $0xd8] sm:$0xff] %vm298, %v293
  %327 = vst.msk [vmem:[%s3 + $0xe0] sm:$0xff] %vm298, %v294
  %328 = vst.msk [vmem:[%s3 + $0xe8] sm:$0xff] %vm298, %v295
  %329 = vst.msk [vmem:[%s3 + $0xf0] sm:$0xff] %vm298, %v296
  %330 = vst.msk [vmem:[%s3 + $0xf8] sm:$0xff] %vm298, %v297
  // Predicated region
  $region14: #{crnn_attention_forward.4} parent=0 // pred_check
    _
  $region15: #{crnn_attention_forward.4} parent=0 // pred_check_branch
    %332 = sbr.rel (0) target = $region17
  $region16: #{crnn_attention_forward.4} parent=0 // pred_region
    _
  $region17: #{crnn_attention_forward.4} parent=0 // pred_fallthru
    _
  // Predicated region
  $region18: #{crnn_attention_forward.4} parent=0 // pred_check
    _
  $region19: #{crnn_attention_forward.4} parent=0 // pred_check_branch
    %334 = sbr.rel (0) target = $region21
  $region20: #{crnn_attention_forward.4} parent=0 // pred_region
    _
  $region21: #{crnn_attention_forward.4} parent=0 // pred_fallthru
    _

// kernel: crnn_attention_forward.6
$region0: #{crnn_attention_forward.6}
  #allocation0 [shape = 'u32[]', space=smem, size = 0x4, offset = 0x4, fixed_abs, tag = 'smem constant byte address 0x4 - core index']
  #allocation1 [shape = 'u32[72,128]{1,0:T(1,128)}', space=vmem, size = 0x9000, scoped, tag = 'internal scratch']
  #allocation2 [shape = 'f32[2,32]{1,0:T(2,128)}', space=vmem, size = 0x400, scoped, tag = 'scratch operand']
  %s0 = inlined_call_operand.vmem [shape: f32[3,8,2,32], index: 0, kind: input, shape index: {}]
  %s1 = inlined_call_operand.vmem [shape: f32[3,32,32], index: 1, kind: input, shape index: {}]
  %s2 = inlined_call_operand.vmem [shape: f32[3,1,32], index: 2, kind: input, shape index: {}]
  %s3 = inlined_call_operand.vmem [shape: f32[8,2,32], index: 3, kind: output, shape index: {}]
  %s4 = sld [smem:[#allocation0]]
  $region83: #{crnn_attention_forward.6} parent=0
    _
  %s6 = ssub.s32 1, %s4
  %s7 = scalar_select 0, %s6, %s4
  $region1: #{crnn_attention_forward.6} parent=0
    #allocation3 [shape = 'u8[6144]{0}', space=vmem, size = 0x1800, scoped, tag = 'input window, operand 0']
    loop: start=0, step=1, limit=10
    $region2: #{crnn_attention_forward.6} parent=1 // loop_pre_header
      _
    $region3: #{crnn_attention_forward.6} parent=1 // loop_header
      %s9 = sphi 0, %s13
      %p10 = scmp.ge.s32.totalorder %s9, 10
      %s19 = sphi 0, %s21
      %s22 = sphi 0, %s19
      %s23 = sphi 0, %s22
      %s39 = sphi 0, %s23
      %s43 = sphi 0, %s43
      %s45 = sphi 0, %s43
      %s46 = sphi 0, %s45
      %s60 = sphi 0, %s46
      %s64 = sphi 0, %s64
      %s66 = sphi 0, %s64
      %s67 = sphi 0, %s66
      %s81 = sphi 0, %s67
      %s87 = sphi 0, %s89
      %s90 = sphi 0, %s87
      %s91 = sphi 0, %s90
      %s107 = sphi 0, %s91
    $region4: #{crnn_attention_forward.6} parent=1 // loop_header_branch
      %12 = sbr.rel (%p10) target = $region8
    $region5: #{crnn_attention_forward.6} parent=1 // loop_body
      %s14 = ssub.s32 %s9, 1
      %s15 = ssub.s32 %s9, 2
      %s16 = sadd.s32 %s9, 1
      %s17 = ssub.s32 %s9, %s16
      %p18 = scmp.eq.s32.totalorder %s17, 0
      %s20 = sadd.s32 %s19, 1
      %s21 = scalar_select %p18, %s19, %s20
      %p24 = pneg %p18
      %p25 = scmp.eq.s32.totalorder %s9, 7
      %p26 = por %p24, %p25
      %p27 = scmp.ne.s32.totalorder %s19, %s22
      %p28 = scmp.eq.s32.totalorder %s9, 0
      %p29 = por %p27, %p28
      %p30 = scmp.ne.s32.totalorder %s19, %s22
      %p31 = scmp.eq.s32.totalorder %s14, 7
      %p32 = por %p30, %p31
      %p33 = scmp.ne.s32.totalorder %s22, %s23
      %p34 = scmp.eq.s32.totalorder %s14, 0
      %p35 = por %p33, %p34
      %p36 = scmp.ne.s32.totalorder %s22, %s23
      %p37 = scmp.eq.s32.totalorder %s15, 7
      %p38 = por %p36, %p37
      %p40 = scmp.ne.s32.totalorder %s23, %s39
      %p41 = scmp.eq.s32.totalorder %s15, 0
      %p42 = por %p40, %p41
      %s44 = sadd.s32 %s43, 1
      %p47 = scmp.eq.s32.totalorder %s9, 7
      %p48 = scmp.ne.s32.totalorder %s43, %s45
      %p49 = scmp.eq.s32.totalorder %s9, 0
      %p50 = por %p48, %p49
      %p51 = scmp.ne.s32.totalorder %s43, %s45
      %p52 = scmp.eq.s32.totalorder %s14, 7
      %p53 = por %p51, %p52
      %p54 = scmp.ne.s32.totalorder %s45, %s46
      %p55 = scmp.eq.s32.totalorder %s14, 0
      %p56 = por %p54, %p55
      %p57 = scmp.ne.s32.totalorder %s45, %s46
      %p58 = scmp.eq.s32.totalorder %s15, 7
      %p59 = por %p57, %p58
      %p61 = scmp.ne.s32.totalorder %s46, %s60
      %p62 = scmp.eq.s32.totalorder %s15, 0
      %p63 = por %p61, %p62
      %s65 = sadd.s32 %s64, 1
      %p68 = scmp.eq.s32.totalorder %s9, 7
      %p69 = scmp.ne.s32.totalorder %s64, %s66
      %p70 = scmp.eq.s32.totalorder %s9, 0
      %p71 = por %p69, %p70
      %p72 = scmp.ne.s32.totalorder %s64, %s66
      %p73 = scmp.eq.s32.totalorder %s14, 7
      %p74 = por %p72, %p73
      %p75 = scmp.ne.s32.totalorder %s66, %s67
      %p76 = scmp.eq.s32.totalorder %s14, 0
      %p77 = por %p75, %p76
      %p78 = scmp.ne.s32.totalorder %s66, %s67
      %p79 = scmp.eq.s32.totalorder %s15, 7
      %p80 = por %p78, %p79
      %p82 = scmp.ne.s32.totalorder %s67, %s81
      %p83 = scmp.eq.s32.totalorder %s15, 0
      %p84 = por %p82, %p83
      %s85 = ssub.s32 %s9, %s16
      %p86 = scmp.eq.s32.totalorder %s85, 0
      %s88 = sadd.s32 %s87, 1
      %s89 = scalar_select %p86, %s87, %s88
      %p92 = pneg %p86
      %p93 = scmp.eq.s32.totalorder %s9, 7
      %p94 = por %p92, %p93
      %p95 = scmp.ne.s32.totalorder %s87, %s90
      %p96 = scmp.eq.s32.totalorder %s9, 0
      %p97 = por %p95, %p96
      %p98 = scmp.ne.s32.totalorder %s87, %s90
      %p99 = scmp.eq.s32.totalorder %s14, 7
      %p100 = por %p98, %p99
      %p101 = scmp.ne.s32.totalorder %s90, %s91
      %p102 = scmp.eq.s32.totalorder %s14, 0
      %p103 = por %p101, %p102
      %p104 = scmp.ne.s32.totalorder %s90, %s91
      %p105 = scmp.eq.s32.totalorder %s15, 7
      %p106 = por %p104, %p105
      %p108 = scmp.ne.s32.totalorder %s91, %s107
      %p109 = scmp.eq.s32.totalorder %s15, 0
      %p110 = por %p108, %p109
      %p111 = scmp.le.s32.totalorder 1, %s9
      %p112 = scmp.lt.s32.totalorder %s9, 9
      %p113 = pnand %p111, %p112
      %p114 = pneg %p113
      // Predicated region
      $region9: #{crnn_attention_forward.6} parent=5 // pred_check
        _
      $region10: #{crnn_attention_forward.6} parent=5 // pred_check_branch
        %116 = sbr.rel (%p113) target = $region12
      $region11: #{crnn_attention_forward.6} parent=5 // pred_region
        %s117 = ssub.s32 %s9, 1
        // Predicated region
        $region13: #{crnn_attention_forward.6} parent=11 // pred_check
          %p118 = pneg %p56
        $region14: #{crnn_attention_forward.6} parent=11 // pred_check_branch
          %120 = sbr.rel (%p118) target = $region16
        $region15: #{crnn_attention_forward.6} parent=11 // pred_region
          _
        $region16: #{crnn_attention_forward.6} parent=11 // pred_fallthru
          _
        // Predicated region
        $region17: #{crnn_attention_forward.6} parent=11 // pred_check
          %p121 = pneg %p77
        $region18: #{crnn_attention_forward.6} parent=11 // pred_check_branch
          %123 = sbr.rel (%p121) target = $region20
        $region19: #{crnn_attention_forward.6} parent=11 // pred_region
          _
        $region20: #{crnn_attention_forward.6} parent=11 // pred_fallthru
          _
      $region12: #{crnn_attention_forward.6} parent=5 // pred_fallthru
        _
      %p124 = scmp.lt.s32.totalorder %s9, 8
      // Predicated region
      $region21: #{crnn_attention_forward.6} parent=5 // pred_check
        %p125 = pneg %p124
      $region22: #{crnn_attention_forward.6} parent=5 // pred_check_branch
        %127 = sbr.rel (%p125) target = $region24
      $region23: #{crnn_attention_forward.6} parent=5 // pred_region
        // Predicated region
        $region25: #{crnn_attention_forward.6} parent=23 // pred_check
          %p128 = pneg %p29
        $region26: #{crnn_attention_forward.6} parent=23 // pred_check_branch
          %130 = sbr.rel (%p128) target = $region28
        $region27: #{crnn_attention_forward.6} parent=23 // pred_region
          %s131 = sand.u32 %s19, 1
          %s132 = sand.u32 %s19, 1
          %s133 = smul.addr %s132, 6
          %s134 = scalar_lea.vmem [#allocation3], %s133
          %s135 = smul.addr %s9, 2
          %s136 = scalar_lea.vmem %s0, %s135
          // Predicated region
          $region29: #{crnn_attention_forward.6} parent=27 // pred_check
            _
          $region30: #{crnn_attention_forward.6} parent=27 // pred_check_branch
            %138 = sbr.rel (0) target = $region32
          $region31: #{crnn_attention_forward.6} parent=27 // pred_region
            // Predicated region
            $region33: #{crnn_attention_forward.6} parent=31 // pred_check
              _
            $region34: #{crnn_attention_forward.6} parent=31 // pred_check_branch
              %140 = sbr.rel target = $region36
            $region35: #{crnn_attention_forward.6} parent=31 // pred_region
              // Predicated region
              $region48: #{crnn_attention_forward.6} parent=35 // pred_check
                _
              $region49: #{crnn_attention_forward.6} parent=35 // pred_check_branch
                %160 = sbr.rel (0) target = $region51
              $region50: #{crnn_attention_forward.6} parent=35 // pred_region
                %s162 = ssub.s32 4, 1
                loop: start=0, step=1, limit=1
                $region52: #{crnn_attention_forward.6} parent=50 // loop_pre_header
                  _
                $region53: #{crnn_attention_forward.6} parent=50 // loop_header
                  %s164 = sphi 0, %s168
                  %p165 = scmp.ge.s32.totalorder %s164, 1
                  %s169 = sphi %s136, %s136
                  %s170 = sphi %s134, %s134
                $region54: #{crnn_attention_forward.6} parent=50 // loop_header_branch
                  %167 = sbr.rel (%p165) target = $region58
                $region55: #{crnn_attention_forward.6} parent=50 // loop_body
                  %v171 = vld [vmem:[%s169] sm:%s162]
                  %172 = vst [vmem:[%s170] sm:%s162] %v171
                  %v173 = vld [vmem:[%s169 + $0x10] sm:%s162]
                  %174 = vst [vmem:[%s170 + $0x2] sm:%s162] %v173
                  %v175 = vld [vmem:[%s169 + $0x20] sm:%s162]
                  %176 = vst [vmem:[%s170 + $0x4] sm:%s162] %v175
                $region56: #{crnn_attention_forward.6} parent=50 // loop_footer
                  %s168 = sadd.s32 1, %s164
                $region57: #{crnn_attention_forward.6} parent=50 // loop_footer_branch
                  %163 = sbr.rel target = $region53
                $region58: #{crnn_attention_forward.6} parent=50 // loop_exit
                  _
              $region51: #{crnn_attention_forward.6} parent=35 // pred_fallthru
                _
            $region36: #{crnn_attention_forward.6} parent=31 // pred_fallthru
              _
            // Predicated region
            $region37: #{crnn_attention_forward.6} parent=31 // pred_check
              _
            $region38: #{crnn_attention_forward.6} parent=31 // pred_check_branch
              %142 = sbr.rel (0) target = $region40
            $region39: #{crnn_attention_forward.6} parent=31 // pred_region
              %s144 = ssub.s32 4, 1
              loop: start=0, step=1, limit=1
              $region41: #{crnn_attention_forward.6} parent=39 // loop_pre_header
                _
              $region42: #{crnn_attention_forward.6} parent=39 // loop_header
                %s146 = sphi 0, %s150
                %p147 = scmp.ge.s32.totalorder %s146, 1
                %s151 = sphi %s136, %s136
                %s152 = sphi %s134, %s134
              $region43: #{crnn_attention_forward.6} parent=39 // loop_header_branch
                %149 = sbr.rel (%p147) target = $region47
              $region44: #{crnn_attention_forward.6} parent=39 // loop_body
                %v153 = vld [vmem:[%s151] sm:%s144]
                %154 = vst [vmem:[%s152] sm:%s144] %v153
                %v155 = vld [vmem:[%s151 + $0x10] sm:%s144]
                %156 = vst [vmem:[%s152 + $0x2] sm:%s144] %v155
                %v157 = vld [vmem:[%s151 + $0x20] sm:%s144]
                %158 = vst [vmem:[%s152 + $0x4] sm:%s144] %v157
              $region45: #{crnn_attention_forward.6} parent=39 // loop_footer
                %s150 = sadd.s32 1, %s146
              $region46: #{crnn_attention_forward.6} parent=39 // loop_footer_branch
                %145 = sbr.rel target = $region42
              $region47: #{crnn_attention_forward.6} parent=39 // loop_exit
                _
            $region40: #{crnn_attention_forward.6} parent=31 // pred_fallthru
              _
          $region32: #{crnn_attention_forward.6} parent=27 // pred_fallthru
            _
          %177 = vnop
        $region28: #{crnn_attention_forward.6} parent=23 // pred_fallthru
          _
      $region24: #{crnn_attention_forward.6} parent=5 // pred_fallthru
        _
      %p178 = scmp.le.s32.totalorder 1, %s9
      %p179 = scmp.lt.s32.totalorder %s9, 9
      %p180 = pnand %p178, %p179
      %p181 = pneg %p180
      // Predicated region
      $region59: #{crnn_attention_forward.6} parent=5 // pred_check
        _
      $region60: #{crnn_attention_forward.6} parent=5 // pred_check_branch
        %183 = sbr.rel (%p180) target = $region62
      $region61: #{crnn_attention_forward.6} parent=5 // pred_region
        %s184 = ssub.s32 %s9, 1
        %s185 = sand.u32 %s22, 1
        %s186 = sand.u32 %s22, 1
        %s187 = smul.addr %s186, 6
        %s188 = scalar_lea.vmem [#allocation3], %s187
        // Predicated region
        $region63: #{crnn_attention_forward.6} parent=61 // pred_check
          %p189 = pneg %p35
        $region64: #{crnn_attention_forward.6} parent=61 // pred_check_branch
          %191 = sbr.rel (%p189) target = $region66
        $region65: #{crnn_attention_forward.6} parent=61 // pred_region
          _
        $region66: #{crnn_attention_forward.6} parent=61 // pred_fallthru
          _
        %s192 = sand.u32 %s22, 1
        %s193 = sand.u32 %s22, 1
        %s194 = smul.addr %s193, 6
        %s195 = scalar_lea.vmem [#allocation3], %s194
        %p196 = pneg %p35
        %p197 = pneg %p32
        %p198 = pneg %p56
        %p199 = pneg %p53
        %p200 = pneg %p77
        %p201 = pneg %p74
        %p202 = pneg %p103
        %p203 = pneg %p100
        %p204 = scmp.lt.s32.totalorder %s14, 7
        %s205 = scalar_select %p204, %s14, 7
        %s206 = smul.addr %s205, 2
        %s207 = scalar_lea.vmem %s3, %s206
        %p208 = scmp.lt.s32.totalorder %s14, 7
        %s209 = scalar_select %p208, %s14, 7
        %s210 = smul.addr %s209, 2
        %s211 = scalar_lea.vmem %s3, %s210
        %p212 = scmp.eq.s32.totalorder %s14, 0
        // Predicated region
        $region67: #{crnn_attention_forward.6} parent=61 // pred_check
          %p213 = pneg %p212
        $region68: #{crnn_attention_forward.6} parent=61 // pred_check_branch
          %215 = sbr.rel (%p213) target = $region70
        $region69: #{crnn_attention_forward.6} parent=61 // pred_region
          %vm216 = vcmask 254976
          %217 = vst.msk [vmem:[#allocation2] sm:$0x3] %vm216, 0.0
        $region70: #{crnn_attention_forward.6} parent=61 // pred_fallthru
          _
        %v218 = vld [vmem:[#allocation2] sm:$0x3]
        %v219 = vld [vmem:[%s1] sm:$0xff]
        %v220 = vld [vmem:[%s1 + $0x8] sm:$0xff]
        %v221 = vld [vmem:[%s1 + $0x10] sm:$0xff]
        %v222 = vld [vmem:[%s1 + $0x18] sm:$0xff]
        %v223 = vld [vmem:[%s2] sm:$0x1]
        %v225 = vperm.slane %v223, 0
        %vm227 = vcmask 261120
        %v229 = vsel %vm227, %v218, 0
        %231 = vmatpush.msra.mxu0 0.0
        %232 = vmatpush.msra.mxu0 0.0
        %233 = vmatpush.msra.mxu0 0.0
        %234 = vmatpush.msra.mxu0 0.0
        %235 = vmatpush.msra.mxu0 0.0
        %236 = vmatpush.msra.mxu0 0.0
        %237 = vmatpush.msra.mxu0 0.0
        %238 = vmatpush.msra.mxu0 0.0
        %239 = vmatpush.msra.mxu0 0.0
        %240 = vmatpush.msra.mxu0 0.0
        %241 = vmatpush.msra.mxu0 0.0
        %242 = vmatpush.msra.mxu0 0.0
        %243 = vmatpush.msra.mxu0 %v222
        %244 = vmatpush.msra.mxu0 %v221
        %245 = vmatpush.msra.mxu0 %v220
        %246 = vmatpush.msra.mxu0 %v219
        %247 = vmatmul.f32.gmra.mxu0 %v229
        %v248 = vpop.f32.mrf.mxu0
        %v249 = vadd.f32 %v225, %v248
        %250 = vdwg.mxu0
        %s251 = scalar_lea.vmem %s1, 32
        %v252 = vld [vmem:[%s251] sm:$0xff]
        %v253 = vld [vmem:[%s251 + $0x8] sm:$0xff]
        %v254 = vld [vmem:[%s251 + $0x10] sm:$0xff]
        %v255 = vld [vmem:[%s251 + $0x18] sm:$0xff]
        %s256 = scalar_lea.vmem %s2, 1
        %v257 = vld [vmem:[%s256] sm:$0x1]
        %v259 = vperm.slane %v257, 0
        %261 = vmatpush.msra.mxu0 0.0
        %262 = vmatpush.msra.mxu0 0.0
        %263 = vmatpush.msra.mxu0 0.0
        %264 = vmatpush.msra.mxu0 0.0
        %265 = vmatpush.msra.mxu0 0.0
        %266 = vmatpush.msra.mxu0 0.0
        %267 = vmatpush.msra.mxu0 0.0
        %268 = vmatpush.msra.mxu0 0.0
        %269 = vmatpush.msra.mxu0 0.0
        %270 = vmatpush.msra.mxu0 0.0
        %271 = vmatpush.msra.mxu0 0.0
        %272 = vmatpush.msra.mxu0 0.0
        %273 = vmatpush.msra.mxu0 %v255
        %274 = vmatpush.msra.mxu0 %v254
        %275 = vmatpush.msra.mxu0 %v253
        %276 = vmatpush.msra.mxu0 %v252
        %277 = vmatmul.f32.gmra.mxu0 %v229
        %v278 = vpop.f32.mrf.mxu0
        %v279 = vadd.f32 %v259, %v278
        %280 = vdwg.mxu0
        %s281 = scalar_lea.vmem %s1, 64
        %v282 = vld [vmem:[%s281] sm:$0xff]
        %v283 = vld [vmem:[%s281 + $0x8] sm:$0xff]
        %v284 = vld [vmem:[%s281 + $0x10] sm:$0xff]
        %v285 = vld [vmem:[%s281 + $0x18] sm:$0xff]
        %s286 = scalar_lea.vmem %s2, 2
        %v287 = vld [vmem:[%s286] sm:$0x1]
        %v289 = vperm.slane %v287, 0
        %291 = vmatpush.msra.mxu0 0.0
        %292 = vmatpush.msra.mxu0 0.0
        %293 = vmatpush.msra.mxu0 0.0
        %294 = vmatpush.msra.mxu0 0.0
        %295 = vmatpush.msra.mxu0 0.0
        %296 = vmatpush.msra.mxu0 0.0
        %297 = vmatpush.msra.mxu0 0.0
        %298 = vmatpush.msra.mxu0 0.0
        %299 = vmatpush.msra.mxu0 0.0
        %300 = vmatpush.msra.mxu0 0.0
        %301 = vmatpush.msra.mxu0 0.0
        %302 = vmatpush.msra.mxu0 0.0
        %303 = vmatpush.msra.mxu0 %v285
        %304 = vmatpush.msra.mxu0 %v284
        %305 = vmatpush.msra.mxu0 %v283
        %306 = vmatpush.msra.mxu0 %v282
        %307 = vmatmul.f32.gmra.mxu0 %v229
        %v308 = vpop.f32.mrf.mxu0
        %v309 = vadd.f32 %v289, %v308
        %310 = vdwg.mxu0
        %v311 = vld [vmem:[%s188] sm:$0x3]
        %v312 = vadd.f32 %v311, %v249
        %v313 = vxor.u32 %v312, 2147483648
        %v314 = vmul.f32 %v313, 1.442695
        %v315 = vpow.pop %v314
        %v316 = vadd.f32 %v315, 1.0
        %v317 = vrcp.pop %v316
        %v318 = vmul.f32 %v316, %v317
        %v319 = vsub.f32 1.0, %v318
        %v320 = vmul.f32 %v317, %v319
        %v321 = vadd.f32 %v317, %v320
        %vm322 = vweird.f32 %v316
        %vm323 = vweird.f32 %v317
        %vm324 = vmor %vm322, %vm323
        %v325 = vsel %vm324, %v317, %v321
        %v326 = vand.u32 2147483647, %v316
        %vm327 = vcmp.eq.f32.partialorder %v326, 8.507059e+37
        %v328 = vand.u32 %v316, 2147483648
        %v329 = vor.u32 1.1754944e-38, %v328
        %v330 = vsel %vm327, %v329, %v325
        %v331 = vmul.f32 1.0, %v330
        %s332 = scalar_lea.vmem %s188, 2 [#allocation3]
        %v333 = vld [vmem:[%s332] sm:$0x3]
        %v334 = vadd.f32 %v333, %v279
        %v335 = vxor.u32 %v334, 2147483648
        %v336 = vmul.f32 %v335, 1.442695
        %v337 = vpow.pop %v336
        %v338 = vadd.f32 %v337, 1.0
        %v339 = vrcp.pop %v338
        %v340 = vmul.f32 %v338, %v339
        %v341 = vsub.f32 1.0, %v340
        %v342 = vmul.f32 %v339, %v341
        %v343 = vadd.f32 %v339, %v342
        %vm344 = vweird.f32 %v338
        %vm345 = vweird.f32 %v339
        %vm346 = vmor %vm344, %vm345
        %v347 = vsel %vm346, %v339, %v343
        %v348 = vand.u32 2147483647, %v338
        %vm349 = vcmp.eq.f32.partialorder %v348, 8.507059e+37
        %v350 = vand.u32 %v338, 2147483648
        %v351 = vor.u32 1.1754944e-38, %v350
        %v352 = vsel %vm349, %v351, %v347
        %v353 = vmul.f32 1.0, %v352
        %s354 = scalar_lea.vmem %s188, 4 [#allocation3]
        %v355 = vld [vmem:[%s354] sm:$0x3]
        %v356 = vmul.f32 %v331, %v309
        %v357 = vadd.f32 %v355, %v356
        %v358 = vtanh.pop %v357
        %v359 = vsub.f32 1.0, %v353
        %v360 = vmul.f32 %v359, %v358
        %v361 = vmul.f32 %v353, %v218
        %v362 = vadd.f32 %v360, %v361
        %vm363 = vcmask 254976
        %364 = vst.msk [vmem:[#allocation2] sm:$0x3] %vm363, %v362
        %365 = vst.msk [vmem:[%s211] sm:$0x3] %vm363, %v362
        %p366 = scmp.lt.s32.totalorder %s14, 7
        %s367 = scalar_select %p366, %s14, 7
        %s368 = smul.addr %s367, 2
        %s369 = scalar_lea.vmem %s3, %s368
        // Predicated region
        $region71: #{crnn_attention_forward.6} parent=61 // pred_check
          %p370 = pneg %p100
        $region72: #{crnn_attention_forward.6} parent=61 // pred_check_branch
          %372 = sbr.rel (%p370) target = $region74
        $region73: #{crnn_attention_forward.6} parent=61 // pred_region
          _
        $region74: #{crnn_attention_forward.6} parent=61 // pred_fallthru
          _
      $region62: #{crnn_attention_forward.6} parent=5 // pred_fallthru
        _
      %p373 = scmp.le.s32.totalorder 2, %s9
      // Predicated region
      $region75: #{crnn_attention_forward.6} parent=5 // pred_check
        %p374 = pneg %p373
      $region76: #{crnn_attention_forward.6} parent=5 // pred_check_branch
        %376 = sbr.rel (%p374) target = $region78
      $region77: #{crnn_attention_forward.6} parent=5 // pred_region
        %s377 = ssub.s32 %s9, 2
        // Predicated region
        $region79: #{crnn_attention_forward.6} parent=77 // pred_check
          %p378 = pneg %p106
        $region80: #{crnn_attention_forward.6} parent=77 // pred_check_branch
          %380 = sbr.rel (%p378) target = $region82
        $region81: #{crnn_attention_forward.6} parent=77 // pred_region
          %p381 = scmp.lt.s32.totalorder %s15, 7
          %s382 = scalar_select %p381, %s15, 7
          %s383 = smul.addr %s382, 2
          %s384 = scalar_lea.vmem %s3, %s383
        $region82: #{crnn_attention_forward.6} parent=77 // pred_fallthru
          _
      $region78: #{crnn_attention_forward.6} parent=5 // pred_fallthru
        _
    $region6: #{crnn_attention_forward.6} parent=1 // loop_footer
      %s13 = sadd.s32 1, %s9
    $region7: #{crnn_attention_forward.6} parent=1 // loop_footer_branch
      %8 = sbr.rel target = $region3
    $region8: #{crnn_attention_forward.6} parent=1 // loop_exit
      _

// kernel: crnn_attention_forward.7
$region0: #{crnn_attention_forward.7}
  #allocation0 [shape = 'u32[]', space=smem, size = 0x4, offset = 0x4, fixed_abs, tag = 'smem constant byte address 0x4 - core index']
  #allocation1 [shape = 'u32[72,128]{1,0:T(1,128)}', space=vmem, size = 0x9000, scoped, tag = 'internal scratch']
  #allocation2 [shape = 'f32[2,32]{1,0:T(2,128)}', space=vmem, size = 0x400, scoped, tag = 'scratch operand']
  #allocation3 [shape = 'f32[2,12]{1,0:T(2,128)}', space=vmem, size = 0x400, scoped, tag = 'scratch operand']
  %s0 = inlined_call_operand.vmem [shape: f32[2,32], index: 0, kind: input, shape index: {}]
  %s1 = inlined_call_operand.vmem [shape: f32[8,2,32], index: 1, kind: input, shape index: {}]
  %s2 = inlined_call_operand.vmem [shape: f32[8,2,1], index: 2, kind: input, shape index: {}]
  %s3 = inlined_call_operand.vmem [shape: f32[12,32], index: 3, kind: input, shape index: {}]
  %s4 = inlined_call_operand.vmem [shape: f32[3,32,32], index: 4, kind: input, shape index: {}]
  %s5 = inlined_call_operand.vmem [shape: f32[3,32,32], index: 5, kind: input, shape index: {}]
  %s6 = inlined_call_operand.vmem [shape: f32[3,1,32], index: 6, kind: input, shape index: {}]
  %s7 = inlined_call_operand.vmem [shape: f32[3,1,32], index: 7, kind: input, shape index: {}]
  %s8 = inlined_call_operand.vmem [shape: f32[32,32], index: 8, kind: input, shape index: {}]
  %s9 = inlined_call_operand.vmem [shape: f32[32,32], index: 9, kind: input, shape index: {}]
  %s10 = inlined_call_operand.vmem [shape: f32[1,32], index: 10, kind: input, shape index: {}]
  %s11 = inlined_call_operand.vmem [shape: f32[32,12], index: 11, kind: input, shape index: {}]
  %s12 = inlined_call_operand.vmem [shape: f32[1,12], index: 12, kind: input, shape index: {}]
  %s13 = inlined_call_operand.vmem [shape: f32[8,2,12], index: 13, kind: output, shape index: {0}]
  %s14 = inlined_call_operand.vmem [shape: f32[8,8,2,1], index: 14, kind: output, shape index: {1}]
  %s15 = inlined_call_operand.hbm [shape: f32[2,32], index: 15, kind: output, shape index: {2}]
  %16 = xla_tuple %s13, %s14, %s15
  %s17 = sld [smem:[#allocation0]]
  $region105: #{crnn_attention_forward.7} parent=0
    _
  %s19 = ssub.s32 1, %s17
  %s20 = scalar_select 0, %s19, %s17
  $region1: #{crnn_attention_forward.7} parent=0
    #allocation4 [shape = 'u8[1024]{0}', space=vmem, size = 0x400, scoped, tag = 'output window, operand 2, single buffered']
    #allocation5 [shape = 's32[2]{0}', space=sflag, size = 0x8, scoped, tag = 'scoped memory for crnn_attention_forward.7']
    %21 = vsyncpa [#allocation5], 0
    loop: start=0, step=1, limit=10
    $region2: #{crnn_attention_forward.7} parent=1 // loop_pre_header
      _
    $region3: #{crnn_attention_forward.7} parent=1 // loop_header
      %s23 = sphi 0, %s27
      %p24 = scmp.ge.s32.totalorder %s23, 10
      %s31 = sphi 0, %s31
      %s33 = sphi 0, %s31
      %s34 = sphi 0, %s33
      %s48 = sphi 0, %s34
      %s52 = sphi 0, %s52
      %s54 = sphi 0, %s52
      %s55 = sphi 0, %s54
      %s69 = sphi 0, %s55
      %s73 = sphi 0, %s73
      %s75 = sphi 0, %s73
      %s76 = sphi 0, %s75
      %s90 = sphi 0, %s76
      %s94 = sphi 0, %s94
      %s96 = sphi 0, %s94
      %s97 = sphi 0, %s96
      %s111 = sphi 0, %s97
      %s115 = sphi 0, %s115
      %s117 = sphi 0, %s115
      %s118 = sphi 0, %s117
      %s132 = sphi 0, %s118
      %s136 = sphi 0, %s136
      %s138 = sphi 0, %s136
      %s139 = sphi 0, %s138
      %s153 = sphi 0, %s139
      %s157 = sphi 0, %s157
      %s159 = sphi 0, %s157
      %s160 = sphi 0, %s159
      %s174 = sphi 0, %s160
      %s178 = sphi 0, %s178
      %s180 = sphi 0, %s178
      %s181 = sphi 0, %s180
      %s195 = sphi 0, %s181
      %s199 = sphi 0, %s199
      %s201 = sphi 0, %s199
      %s202 = sphi 0, %s201
      %s216 = sphi 0, %s202
      %s220 = sphi 0, %s220
      %s222 = sphi 0, %s220
      %s223 = sphi 0, %s222
      %s237 = sphi 0, %s223
      %s241 = sphi 0, %s241
      %s243 = sphi 0, %s241
      %s244 = sphi 0, %s243
      %s258 = sphi 0, %s244
      %s262 = sphi 0, %s262
      %s264 = sphi 0, %s262
      %s265 = sphi 0, %s264
      %s279 = sphi 0, %s265
      %s283 = sphi 0, %s283
      %s285 = sphi 0, %s283
      %s286 = sphi 0, %s285
      %s300 = sphi 0, %s286
      %s306 = sphi 0, %s308
      %s309 = sphi 0, %s306
      %s310 = sphi 0, %s309
      %s326 = sphi 0, %s310
      %s332 = sphi 0, %s334
      %s335 = sphi 0, %s332
      %s336 = sphi 0, %s335
      %s352 = sphi 0, %s336
      %s356 = sphi 0, %s356
      %s358 = sphi 0, %s356
      %s359 = sphi 0, %s358
      %s373 = sphi 0, %s359
    $region4: #{crnn_attention_forward.7} parent=1 // loop_header_branch
      %26 = sbr.rel (%p24) target = $region8
    $region5: #{crnn_attention_forward.7} parent=1 // loop_body
      %s28 = ssub.s32 %s23, 1
      %s29 = ssub.s32 %s23, 2
      %s30 = sadd.s32 %s23, 1
      %s32 = sadd.s32 %s31, 1
      %p35 = scmp.eq.s32.totalorder %s23, 7
      %p36 = scmp.ne.s32.totalorder %s31, %s33
      %p37 = scmp.eq.s32.totalorder %s23, 0
      %p38 = por %p36, %p37
      %p39 = scmp.ne.s32.totalorder %s31, %s33
      %p40 = scmp.eq.s32.totalorder %s28, 7
      %p41 = por %p39, %p40
      %p42 = scmp.ne.s32.totalorder %s33, %s34
      %p43 = scmp.eq.s32.totalorder %s28, 0
      %p44 = por %p42, %p43
      %p45 = scmp.ne.s32.totalorder %s33, %s34
      %p46 = scmp.eq.s32.totalorder %s29, 7
      %p47 = por %p45, %p46
      %p49 = scmp.ne.s32.totalorder %s34, %s48
      %p50 = scmp.eq.s32.totalorder %s29, 0
      %p51 = por %p49, %p50
      %s53 = sadd.s32 %s52, 1
      %p56 = scmp.eq.s32.totalorder %s23, 7
      %p57 = scmp.ne.s32.totalorder %s52, %s54
      %p58 = scmp.eq.s32.totalorder %s23, 0
      %p59 = por %p57, %p58
      %p60 = scmp.ne.s32.totalorder %s52, %s54
      %p61 = scmp.eq.s32.totalorder %s28, 7
      %p62 = por %p60, %p61
      %p63 = scmp.ne.s32.totalorder %s54, %s55
      %p64 = scmp.eq.s32.totalorder %s28, 0
      %p65 = por %p63, %p64
      %p66 = scmp.ne.s32.totalorder %s54, %s55
      %p67 = scmp.eq.s32.totalorder %s29, 7
      %p68 = por %p66, %p67
      %p70 = scmp.ne.s32.totalorder %s55, %s69
      %p71 = scmp.eq.s32.totalorder %s29, 0
      %p72 = por %p70, %p71
      %s74 = sadd.s32 %s73, 1
      %p77 = scmp.eq.s32.totalorder %s23, 7
      %p78 = scmp.ne.s32.totalorder %s73, %s75
      %p79 = scmp.eq.s32.totalorder %s23, 0
      %p80 = por %p78, %p79
      %p81 = scmp.ne.s32.totalorder %s73, %s75
      %p82 = scmp.eq.s32.totalorder %s28, 7
      %p83 = por %p81, %p82
      %p84 = scmp.ne.s32.totalorder %s75, %s76
      %p85 = scmp.eq.s32.totalorder %s28, 0
      %p86 = por %p84, %p85
      %p87 = scmp.ne.s32.totalorder %s75, %s76
      %p88 = scmp.eq.s32.totalorder %s29, 7
      %p89 = por %p87, %p88
      %p91 = scmp.ne.s32.totalorder %s76, %s90
      %p92 = scmp.eq.s32.totalorder %s29, 0
      %p93 = por %p91, %p92
      %s95 = sadd.s32 %s94, 1
      %p98 = scmp.eq.s32.totalorder %s23, 7
      %p99 = scmp.ne.s32.totalorder %s94, %s96
      %p100 = scmp.eq.s32.totalorder %s23, 0
      %p101 = por %p99, %p100
      %p102 = scmp.ne.s32.totalorder %s94, %s96
      %p103 = scmp.eq.s32.totalorder %s28, 7
      %p104 = por %p102, %p103
      %p105 = scmp.ne.s32.totalorder %s96, %s97
      %p106 = scmp.eq.s32.totalorder %s28, 0
      %p107 = por %p105, %p106
      %p108 = scmp.ne.s32.totalorder %s96, %s97
      %p109 = scmp.eq.s32.totalorder %s29, 7
      %p110 = por %p108, %p109
      %p112 = scmp.ne.s32.totalorder %s97, %s111
      %p113 = scmp.eq.s32.totalorder %s29, 0
      %p114 = por %p112, %p113
      %s116 = sadd.s32 %s115, 1
      %p119 = scmp.eq.s32.totalorder %s23, 7
      %p120 = scmp.ne.s32.totalorder %s115, %s117
      %p121 = scmp.eq.s32.totalorder %s23, 0
      %p122 = por %p120, %p121
      %p123 = scmp.ne.s32.totalorder %s115, %s117
      %p124 = scmp.eq.s32.totalorder %s28, 7
      %p125 = por %p123, %p124
      %p126 = scmp.ne.s32.totalorder %s117, %s118
      %p127 = scmp.eq.s32.totalorder %s28, 0
      %p128 = por %p126, %p127
      %p129 = scmp.ne.s32.totalorder %s117, %s118
      %p130 = scmp.eq.s32.totalorder %s29, 7
      %p131 = por %p129, %p130
      %p133 = scmp.ne.s32.totalorder %s118, %s132
      %p134 = scmp.eq.s32.totalorder %s29, 0
      %p135 = por %p133, %p134
      %s137 = sadd.s32 %s136, 1
      %p140 = scmp.eq.s32.totalorder %s23, 7
      %p141 = scmp.ne.s32.totalorder %s136, %s138
      %p142 = scmp.eq.s32.totalorder %s23, 0
      %p143 = por %p141, %p142
      %p144 = scmp.ne.s32.totalorder %s136, %s138
      %p145 = scmp.eq.s32.totalorder %s28, 7
      %p146 = por %p144, %p145
      %p147 = scmp.ne.s32.totalorder %s138, %s139
      %p148 = scmp.eq.s32.totalorder %s28, 0
      %p149 = por %p147, %p148
      %p150 = scmp.ne.s32.totalorder %s138, %s139
      %p151 = scmp.eq.s32.totalorder %s29, 7
      %p152 = por %p150, %p151
      %p154 = scmp.ne.s32.totalorder %s139, %s153
      %p155 = scmp.eq.s32.totalorder %s29, 0
      %p156 = por %p154, %p155
      %s158 = sadd.s32 %s157, 1
      %p161 = scmp.eq.s32.totalorder %s23, 7
      %p162 = scmp.ne.s32.totalorder %s157, %s159
      %p163 = scmp.eq.s32.totalorder %s23, 0
      %p164 = por %p162, %p163
      %p165 = scmp.ne.s32.totalorder %s157, %s159
      %p166 = scmp.eq.s32.totalorder %s28, 7
      %p167 = por %p165, %p166
      %p168 = scmp.ne.s32.totalorder %s159, %s160
      %p169 = scmp.eq.s32.totalorder %s28, 0
      %p170 = por %p168, %p169
      %p171 = scmp.ne.s32.totalorder %s159, %s160
      %p172 = scmp.eq.s32.totalorder %s29, 7
      %p173 = por %p171, %p172
      %p175 = scmp.ne.s32.totalorder %s160, %s174
      %p176 = scmp.eq.s32.totalorder %s29, 0
      %p177 = por %p175, %p176
      %s179 = sadd.s32 %s178, 1
      %p182 = scmp.eq.s32.totalorder %s23, 7
      %p183 = scmp.ne.s32.totalorder %s178, %s180
      %p184 = scmp.eq.s32.totalorder %s23, 0
      %p185 = por %p183, %p184
      %p186 = scmp.ne.s32.totalorder %s178, %s180
      %p187 = scmp.eq.s32.totalorder %s28, 7
      %p188 = por %p186, %p187
      %p189 = scmp.ne.s32.totalorder %s180, %s181
      %p190 = scmp.eq.s32.totalorder %s28, 0
      %p191 = por %p189, %p190
      %p192 = scmp.ne.s32.totalorder %s180, %s181
      %p193 = scmp.eq.s32.totalorder %s29, 7
      %p194 = por %p192, %p193
      %p196 = scmp.ne.s32.totalorder %s181, %s195
      %p197 = scmp.eq.s32.totalorder %s29, 0
      %p198 = por %p196, %p197
      %s200 = sadd.s32 %s199, 1
      %p203 = scmp.eq.s32.totalorder %s23, 7
      %p204 = scmp.ne.s32.totalorder %s199, %s201
      %p205 = scmp.eq.s32.totalorder %s23, 0
      %p206 = por %p204, %p205
      %p207 = scmp.ne.s32.totalorder %s199, %s201
      %p208 = scmp.eq.s32.totalorder %s28, 7
      %p209 = por %p207, %p208
      %p210 = scmp.ne.s32.totalorder %s201, %s202
      %p211 = scmp.eq.s32.totalorder %s28, 0
      %p212 = por %p210, %p211
      %p213 = scmp.ne.s32.totalorder %s201, %s202
      %p214 = scmp.eq.s32.totalorder %s29, 7
      %p215 = por %p213, %p214
      %p217 = scmp.ne.s32.totalorder %s202, %s216
      %p218 = scmp.eq.s32.totalorder %s29, 0
      %p219 = por %p217, %p218
      %s221 = sadd.s32 %s220, 1
      %p224 = scmp.eq.s32.totalorder %s23, 7
      %p225 = scmp.ne.s32.totalorder %s220, %s222
      %p226 = scmp.eq.s32.totalorder %s23, 0
      %p227 = por %p225, %p226
      %p228 = scmp.ne.s32.totalorder %s220, %s222
      %p229 = scmp.eq.s32.totalorder %s28, 7
      %p230 = por %p228, %p229
      %p231 = scmp.ne.s32.totalorder %s222, %s223
      %p232 = scmp.eq.s32.totalorder %s28, 0
      %p233 = por %p231, %p232
      %p234 = scmp.ne.s32.totalorder %s222, %s223
      %p235 = scmp.eq.s32.totalorder %s29, 7
      %p236 = por %p234, %p235
      %p238 = scmp.ne.s32.totalorder %s223, %s237
      %p239 = scmp.eq.s32.totalorder %s29, 0
      %p240 = por %p238, %p239
      %s242 = sadd.s32 %s241, 1
      %p245 = scmp.eq.s32.totalorder %s23, 7
      %p246 = scmp.ne.s32.totalorder %s241, %s243
      %p247 = scmp.eq.s32.totalorder %s23, 0
      %p248 = por %p246, %p247
      %p249 = scmp.ne.s32.totalorder %s241, %s243
      %p250 = scmp.eq.s32.totalorder %s28, 7
      %p251 = por %p249, %p250
      %p252 = scmp.ne.s32.totalorder %s243, %s244
      %p253 = scmp.eq.s32.totalorder %s28, 0
      %p254 = por %p252, %p253
      %p255 = scmp.ne.s32.totalorder %s243, %s244
      %p256 = scmp.eq.s32.totalorder %s29, 7
      %p257 = por %p255, %p256
      %p259 = scmp.ne.s32.totalorder %s244, %s258
      %p260 = scmp.eq.s32.totalorder %s29, 0
      %p261 = por %p259, %p260
      %s263 = sadd.s32 %s262, 1
      %p266 = scmp.eq.s32.totalorder %s23, 7
      %p267 = scmp.ne.s32.totalorder %s262, %s264
      %p268 = scmp.eq.s32.totalorder %s23, 0
      %p269 = por %p267, %p268
      %p270 = scmp.ne.s32.totalorder %s262, %s264
      %p271 = scmp.eq.s32.totalorder %s28, 7
      %p272 = por %p270, %p271
      %p273 = scmp.ne.s32.totalorder %s264, %s265
      %p274 = scmp.eq.s32.totalorder %s28, 0
      %p275 = por %p273, %p274
      %p276 = scmp.ne.s32.totalorder %s264, %s265
      %p277 = scmp.eq.s32.totalorder %s29, 7
      %p278 = por %p276, %p277
      %p280 = scmp.ne.s32.totalorder %s265, %s279
      %p281 = scmp.eq.s32.totalorder %s29, 0
      %p282 = por %p280, %p281
      %s284 = sadd.s32 %s283, 1
      %p287 = scmp.eq.s32.totalorder %s23, 7
      %p288 = scmp.ne.s32.totalorder %s283, %s285
      %p289 = scmp.eq.s32.totalorder %s23, 0
      %p290 = por %p288, %p289
      %p291 = scmp.ne.s32.totalorder %s283, %s285
      %p292 = scmp.eq.s32.totalorder %s28, 7
      %p293 = por %p291, %p292
      %p294 = scmp.ne.s32.totalorder %s285, %s286
      %p295 = scmp.eq.s32.totalorder %s28, 0
      %p296 = por %p294, %p295
      %p297 = scmp.ne.s32.totalorder %s285, %s286
      %p298 = scmp.eq.s32.totalorder %s29, 7
      %p299 = por %p297, %p298
      %p301 = scmp.ne.s32.totalorder %s286, %s300
      %p302 = scmp.eq.s32.totalorder %s29, 0
      %p303 = por %p301, %p302
      %s304 = ssub.s32 %s23, %s30
      %p305 = scmp.eq.s32.totalorder %s304, 0
      %s307 = sadd.s32 %s306, 1
      %s308 = scalar_select %p305, %s306, %s307
      %p311 = pneg %p305
      %p312 = scmp.eq.s32.totalorder %s23, 7
      %p313 = por %p311, %p312
      %p314 = scmp.ne.s32.totalorder %s306, %s309
      %p315 = scmp.eq.s32.totalorder %s23, 0
      %p316 = por %p314, %p315
      %p317 = scmp.ne.s32.totalorder %s306, %s309
      %p318 = scmp.eq.s32.totalorder %s28, 7
      %p319 = por %p317, %p318
      %p320 = scmp.ne.s32.totalorder %s309, %s310
      %p321 = scmp.eq.s32.totalorder %s28, 0
      %p322 = por %p320, %p321
      %p323 = scmp.ne.s32.totalorder %s309, %s310
      %p324 = scmp.eq.s32.totalorder %s29, 7
      %p325 = por %p323, %p324
      %p327 = scmp.ne.s32.totalorder %s310, %s326
      %p328 = scmp.eq.s32.totalorder %s29, 0
      %p329 = por %p327, %p328
      %s330 = ssub.s32 %s23, %s30
      %p331 = scmp.eq.s32.totalorder %s330, 0
      %s333 = sadd.s32 %s332, 1
      %s334 = scalar_select %p331, %s332, %s333
      %p337 = pneg %p331
      %p338 = scmp.eq.s32.totalorder %s23, 7
      %p339 = por %p337, %p338
      %p340 = scmp.ne.s32.totalorder %s332, %s335
      %p341 = scmp.eq.s32.totalorder %s23, 0
      %p342 = por %p340, %p341
      %p343 = scmp.ne.s32.totalorder %s332, %s335
      %p344 = scmp.eq.s32.totalorder %s28, 7
      %p345 = por %p343, %p344
      %p346 = scmp.ne.s32.totalorder %s335, %s336
      %p347 = scmp.eq.s32.totalorder %s28, 0
      %p348 = por %p346, %p347
      %p349 = scmp.ne.s32.totalorder %s335, %s336
      %p350 = scmp.eq.s32.totalorder %s29, 7
      %p351 = por %p349, %p350
      %p353 = scmp.ne.s32.totalorder %s336, %s352
      %p354 = scmp.eq.s32.totalorder %s29, 0
      %p355 = por %p353, %p354
      %s357 = sadd.s32 %s356, 1
      %p360 = scmp.eq.s32.totalorder %s23, 7
      %p361 = scmp.ne.s32.totalorder %s356, %s358
      %p362 = scmp.eq.s32.totalorder %s23, 0
      %p363 = por %p361, %p362
      %p364 = scmp.ne.s32.totalorder %s356, %s358
      %p365 = scmp.eq.s32.totalorder %s28, 7
      %p366 = por %p364, %p365
      %p367 = scmp.ne.s32.totalorder %s358, %s359
      %p368 = scmp.eq.s32.totalorder %s28, 0
      %p369 = por %p367, %p368
      %p370 = scmp.ne.s32.totalorder %s358, %s359
      %p371 = scmp.eq.s32.totalorder %s29, 7
      %p372 = por %p370, %p371
      %p374 = scmp.ne.s32.totalorder %s359, %s373
      %p375 = scmp.eq.s32.totalorder %s29, 0
      %p376 = por %p374, %p375
      %p377 = scmp.le.s32.totalorder 1, %s23
      %p378 = scmp.lt.s32.totalorder %s23, 9
      %p379 = pnand %p377, %p378
      %p380 = pneg %p379
      // Predicated region
      $region9: #{crnn_attention_forward.7} parent=5 // pred_check
        _
      $region10: #{crnn_attention_forward.7} parent=5 // pred_check_branch
        %382 = sbr.rel (%p379) target = $region12
      $region11: #{crnn_attention_forward.7} parent=5 // pred_region
        %s383 = ssub.s32 %s23, 1
        // Predicated region
        $region13: #{crnn_attention_forward.7} parent=11 // pred_check
          %p384 = pneg %p44
        $region14: #{crnn_attention_forward.7} parent=11 // pred_check_branch
          %386 = sbr.rel (%p384) target = $region16
        $region15: #{crnn_attention_forward.7} parent=11 // pred_region
          _
        $region16: #{crnn_attention_forward.7} parent=11 // pred_fallthru
          _
        // Predicated region
        $region17: #{crnn_attention_forward.7} parent=11 // pred_check
          %p387 = pneg %p65
        $region18: #{crnn_attention_forward.7} parent=11 // pred_check_branch
          %389 = sbr.rel (%p387) target = $region20
        $region19: #{crnn_attention_forward.7} parent=11 // pred_region
          _
        $region20: #{crnn_attention_forward.7} parent=11 // pred_fallthru
          _
        // Predicated region
        $region21: #{crnn_attention_forward.7} parent=11 // pred_check
          %p390 = pneg %p86
        $region22: #{crnn_attention_forward.7} parent=11 // pred_check_branch
          %392 = sbr.rel (%p390) target = $region24
        $region23: #{crnn_attention_forward.7} parent=11 // pred_region
          _
        $region24: #{crnn_attention_forward.7} parent=11 // pred_fallthru
          _
        // Predicated region
        $region25: #{crnn_attention_forward.7} parent=11 // pred_check
          %p393 = pneg %p107
        $region26: #{crnn_attention_forward.7} parent=11 // pred_check_branch
          %395 = sbr.rel (%p393) target = $region28
        $region27: #{crnn_attention_forward.7} parent=11 // pred_region
          _
        $region28: #{crnn_attention_forward.7} parent=11 // pred_fallthru
          _
        // Predicated region
        $region29: #{crnn_attention_forward.7} parent=11 // pred_check
          %p396 = pneg %p128
        $region30: #{crnn_attention_forward.7} parent=11 // pred_check_branch
          %398 = sbr.rel (%p396) target = $region32
        $region31: #{crnn_attention_forward.7} parent=11 // pred_region
          _
        $region32: #{crnn_attention_forward.7} parent=11 // pred_fallthru
          _
        // Predicated region
        $region33: #{crnn_attention_forward.7} parent=11 // pred_check
          %p399 = pneg %p149
        $region34: #{crnn_attention_forward.7} parent=11 // pred_check_branch
          %401 = sbr.rel (%p399) target = $region36
        $region35: #{crnn_attention_forward.7} parent=11 // pred_region
          _
        $region36: #{crnn_attention_forward.7} parent=11 // pred_fallthru
          _
        // Predicated region
        $region37: #{crnn_attention_forward.7} parent=11 // pred_check
          %p402 = pneg %p170
        $region38: #{crnn_attention_forward.7} parent=11 // pred_check_branch
          %404 = sbr.rel (%p402) target = $region40
        $region39: #{crnn_attention_forward.7} parent=11 // pred_region
          _
        $region40: #{crnn_attention_forward.7} parent=11 // pred_fallthru
          _
        // Predicated region
        $region41: #{crnn_attention_forward.7} parent=11 // pred_check
          %p405 = pneg %p191
        $region42: #{crnn_attention_forward.7} parent=11 // pred_check_branch
          %407 = sbr.rel (%p405) target = $region44
        $region43: #{crnn_attention_forward.7} parent=11 // pred_region
          _
        $region44: #{crnn_attention_forward.7} parent=11 // pred_fallthru
          _
        // Predicated region
        $region45: #{crnn_attention_forward.7} parent=11 // pred_check
          %p408 = pneg %p212
        $region46: #{crnn_attention_forward.7} parent=11 // pred_check_branch
          %410 = sbr.rel (%p408) target = $region48
        $region47: #{crnn_attention_forward.7} parent=11 // pred_region
          _
        $region48: #{crnn_attention_forward.7} parent=11 // pred_fallthru
          _
        // Predicated region
        $region49: #{crnn_attention_forward.7} parent=11 // pred_check
          %p411 = pneg %p233
        $region50: #{crnn_attention_forward.7} parent=11 // pred_check_branch
          %413 = sbr.rel (%p411) target = $region52
        $region51: #{crnn_attention_forward.7} parent=11 // pred_region
          _
        $region52: #{crnn_attention_forward.7} parent=11 // pred_fallthru
          _
        // Predicated region
        $region53: #{crnn_attention_forward.7} parent=11 // pred_check
          %p414 = pneg %p254
        $region54: #{crnn_attention_forward.7} parent=11 // pred_check_branch
          %416 = sbr.rel (%p414) target = $region56
        $region55: #{crnn_attention_forward.7} parent=11 // pred_region
          _
        $region56: #{crnn_attention_forward.7} parent=11 // pred_fallthru
          _
        // Predicated region
        $region57: #{crnn_attention_forward.7} parent=11 // pred_check
          %p417 = pneg %p275
        $region58: #{crnn_attention_forward.7} parent=11 // pred_check_branch
          %419 = sbr.rel (%p417) target = $region60
        $region59: #{crnn_attention_forward.7} parent=11 // pred_region
          _
        $region60: #{crnn_attention_forward.7} parent=11 // pred_fallthru
          _
        // Predicated region
        $region61: #{crnn_attention_forward.7} parent=11 // pred_check
          %p420 = pneg %p296
        $region62: #{crnn_attention_forward.7} parent=11 // pred_check_branch
          %422 = sbr.rel (%p420) target = $region64
        $region63: #{crnn_attention_forward.7} parent=11 // pred_region
          _
        $region64: #{crnn_attention_forward.7} parent=11 // pred_fallthru
          _
      $region12: #{crnn_attention_forward.7} parent=5 // pred_fallthru
        _
      %p423 = scmp.lt.s32.totalorder %s23, 8
      // Predicated region
      $region65: #{crnn_attention_forward.7} parent=5 // pred_check
        %p424 = pneg %p423
      $region66: #{crnn_attention_forward.7} parent=5 // pred_check_branch
        %426 = sbr.rel (%p424) target = $region68
      $region67: #{crnn_attention_forward.7} parent=5 // pred_region
        _
      $region68: #{crnn_attention_forward.7} parent=5 // pred_fallthru
        _
      %p427 = scmp.le.s32.totalorder 1, %s23
      %p428 = scmp.lt.s32.totalorder %s23, 9
      %p429 = pnand %p427, %p428
      %p430 = pneg %p429
      // Predicated region
      $region69: #{crnn_attention_forward.7} parent=5 // pred_check
        _
      $region70: #{crnn_attention_forward.7} parent=5 // pred_check_branch
        %432 = sbr.rel (%p429) target = $region72
      $region71: #{crnn_attention_forward.7} parent=5 // pred_region
        %s433 = ssub.s32 %s23, 1
        %p434 = pneg %p44
        %p435 = pneg %p41
        %p436 = pneg %p65
        %p437 = pneg %p62
        %p438 = pneg %p86
        %p439 = pneg %p83
        %p440 = pneg %p107
        %p441 = pneg %p104
        %p442 = pneg %p128
        %p443 = pneg %p125
        %p444 = pneg %p149
        %p445 = pneg %p146
        %p446 = pneg %p170
        %p447 = pneg %p167
        %p448 = pneg %p191
        %p449 = pneg %p188
        %p450 = pneg %p212
        %p451 = pneg %p209
        %p452 = pneg %p233
        %p453 = pneg %p230
        %p454 = pneg %p254
        %p455 = pneg %p251
        %p456 = pneg %p275
        %p457 = pneg %p272
        %p458 = pneg %p296
        %p459 = pneg %p293
        %p460 = pneg %p322
        %p461 = pneg %p319
        %p462 = scmp.lt.s32.totalorder %s28, 7
        %s463 = scalar_select %p462, %s28, 7
        %s464 = smul.addr %s463, 2
        %s465 = scalar_lea.vmem %s13, %s464
        %p466 = pneg %p348
        %p467 = pneg %p345
        %p468 = scmp.lt.s32.totalorder %s28, 7
        %s469 = scalar_select %p468, %s28, 7
        %s470 = smul.addr %s469, 8
        %s471 = smul.addr %s470, 2
        %s472 = scalar_lea.vmem %s14, %s471
        %p473 = pneg %p369
        %p474 = pneg %p366
        %p475 = scmp.lt.s32.totalorder %s28, 7
        %s476 = scalar_select %p475, %s28, 7
        %s477 = smul.addr %s476, 2
        %s478 = scalar_lea.vmem %s13, %s477
        %p479 = scmp.lt.s32.totalorder %s28, 7
        %s480 = scalar_select %p479, %s28, 7
        %s481 = smul.addr %s480, 8
        %s482 = smul.addr %s481, 2
        %s483 = scalar_lea.vmem %s14, %s482
        %v484 = vlaneseq
        %v485 = vand.u32 %v484, 127
        %v486 = vcvt.s32.f32 %v485
        %p487 = scmp.eq.s32.totalorder %s28, 0
        // Predicated region
        $region73: #{crnn_attention_forward.7} parent=71 // pred_check
          %p488 = pneg %p487
        $region74: #{crnn_attention_forward.7} parent=71 // pred_check_branch
          %490 = sbr.rel (%p488) target = $region76
        $region75: #{crnn_attention_forward.7} parent=71 // pred_region
          %v491 = vld [vmem:[%s0] sm:$0x3]
          %vm492 = vcmask 254976
          %493 = vst.msk [vmem:[#allocation2] sm:$0x3] %vm492, %v491
          %vm494 = vcmp.eq.f32.partialorder %v486, 1.0
          %v495 = vsel %vm494, 1, 0
          %v496 = vcvt.s32.f32 %v495
          %vm497 = vcmask 91136
          %498 = vst.msk [vmem:[#allocation3] sm:$0x3] %vm497, %v496
        $region76: #{crnn_attention_forward.7} parent=71 // pred_fallthru
          _
        %v499 = vld [vmem:[#allocation3] sm:$0x3]
        %v500 = vld [vmem:[%s3] sm:$0xff]
        %v501 = vld [vmem:[%s3 + $0x8] sm:$0xf]
        %vm502 = vcmask 97280
        %v504 = vsel %vm502, %v499, 0
        %vm506 = vcmask 1043456
        %v508 = vsel %vm506, %v501, 0
        %510 = vmatpush.msra.mxu0 0.0
        %511 = vmatpush.msra.mxu0 0.0
        %512 = vmatpush.msra.mxu0 0.0
        %513 = vmatpush.msra.mxu0 0.0
        %514 = vmatpush.msra.mxu0 0.0
        %515 = vmatpush.msra.mxu0 0.0
        %516 = vmatpush.msra.mxu0 0.0
        %517 = vmatpush.msra.mxu0 0.0
        %518 = vmatpush.msra.mxu0 0.0
        %519 = vmatpush.msra.mxu0 0.0
        %520 = vmatpush.msra.mxu0 0.0
        %521 = vmatpush.msra.mxu0 0.0
        %522 = vmatpush.msra.mxu0 0.0
        %523 = vmatpush.msra.mxu0 0.0
        %524 = vmatpush.msra.mxu0 %v508
        %525 = vmatpush.msra.mxu0 %v500
        %526 = vmatmul.f32.gmra.mxu0 %v504
        %v527 = vpop.f32.mrf.mxu0
        %v528 = vadd.f32 0.0, %v527
        %529 = vdwg.mxu0
        %v530 = vld [vmem:[#allocation2] sm:$0x3]
        %v531 = vld [vmem:[%s4] sm:$0xff]
        %v532 = vld [vmem:[%s4 + $0x8] sm:$0xff]
        %v533 = vld [vmem:[%s4 + $0x10] sm:$0xff]
        %v534 = vld [vmem:[%s4 + $0x18] sm:$0xff]
        %v535 = vld [vmem:[%s6] sm:$0x1]
        %v537 = vperm.slane %v535, 0
        %vm539 = vcmask 261120
        %v541 = vsel %vm539, %v528, 0
        %543 = vmatpush.msra.mxu0 0.0
        %544 = vmatpush.msra.mxu0 0.0
        %545 = vmatpush.msra.mxu0 0.0
        %546 = vmatpush.msra.mxu0 0.0
        %547 = vmatpush.msra.mxu0 0.0
        %548 = vmatpush.msra.mxu0 0.0
        %549 = vmatpush.msra.mxu0 0.0
        %550 = vmatpush.msra.mxu0 0.0
        %551 = vmatpush.msra.mxu0 0.0
        %552 = vmatpush.msra.mxu0 0.0
        %553 = vmatpush.msra.mxu0 0.0
        %554 = vmatpush.msra.mxu0 0.0
        %555 = vmatpush.msra.mxu0 %v534
        %556 = vmatpush.msra.mxu0 %v533
        %557 = vmatpush.msra.mxu0 %v532
        %558 = vmatpush.msra.mxu0 %v531
        %559 = vmatmul.f32.gmra.mxu0 %v541
        %v560 = vpop.f32.mrf.mxu0
        %v561 = vadd.f32 %v537, %v560
        %562 = vdwg.mxu0
        %s563 = scalar_lea.vmem %s4, 32
        %v564 = vld [vmem:[%s563] sm:$0xff]
        %v565 = vld [vmem:[%s563 + $0x8] sm:$0xff]
        %v566 = vld [vmem:[%s563 + $0x10] sm:$0xff]
        %v567 = vld [vmem:[%s563 + $0x18] sm:$0xff]
        %s568 = scalar_lea.vmem %s6, 1
        %v569 = vld [vmem:[%s568] sm:$0x1]
        %v571 = vperm.slane %v569, 0
        %573 = vmatpush.msra.mxu0 0.0
        %574 = vmatpush.msra.mxu0 0.0
        %575 = vmatpush.msra.mxu0 0.0
        %576 = vmatpush.msra.mxu0 0.0
        %577 = vmatpush.msra.mxu0 0.0
        %578 = vmatpush.msra.mxu0 0.0
        %579 = vmatpush.msra.mxu0 0.0
        %580 = vmatpush.msra.mxu0 0.0
        %581 = vmatpush.msra.mxu0 0.0
        %582 = vmatpush.msra.mxu0 0.0
        %583 = vmatpush.msra.mxu0 0.0
        %584 = vmatpush.msra.mxu0 0.0
        %585 = vmatpush.msra.mxu0 %v567
        %586 = vmatpush.msra.mxu0 %v566
        %587 = vmatpush.msra.mxu0 %v565
        %588 = vmatpush.msra.mxu0 %v564
        %589 = vmatmul.f32.gmra.mxu0 %v541
        %v590 = vpop.f32.mrf.mxu0
        %v591 = vadd.f32 %v571, %v590
        %592 = vdwg.mxu0
        %s593 = scalar_lea.vmem %s4, 64
        %v594 = vld [vmem:[%s593] sm:$0xff]
        %v595 = vld [vmem:[%s593 + $0x8] sm:$0xff]
        %v596 = vld [vmem:[%s593 + $0x10] sm:$0xff]
        %v597 = vld [vmem:[%s593 + $0x18] sm:$0xff]
        %s598 = scalar_lea.vmem %s6, 2
        %v599 = vld [vmem:[%s598] sm:$0x1]
        %v601 = vperm.slane %v599, 0
        %603 = vmatpush.msra.mxu0 0.0
        %604 = vmatpush.msra.mxu0 0.0
        %605 = vmatpush.msra.mxu0 0.0
        %606 = vmatpush.msra.mxu0 0.0
        %607 = vmatpush.msra.mxu0 0.0
        %608 = vmatpush.msra.mxu0 0.0
        %609 = vmatpush.msra.mxu0 0.0
        %610 = vmatpush.msra.mxu0 0.0
        %611 = vmatpush.msra.mxu0 0.0
        %612 = vmatpush.msra.mxu0 0.0
        %613 = vmatpush.msra.mxu0 0.0
        %614 = vmatpush.msra.mxu0 0.0
        %615 = vmatpush.msra.mxu0 %v597
        %616 = vmatpush.msra.mxu0 %v596
        %617 = vmatpush.msra.mxu0 %v595
        %618 = vmatpush.msra.mxu0 %v594
        %619 = vmatmul.f32.gmra.mxu0 %v541
        %v620 = vpop.f32.mrf.mxu0
        %v621 = vadd.f32 %v601, %v620
        %622 = vdwg.mxu0
        %v623 = vld [vmem:[%s5] sm:$0xff]
        %v624 = vld [vmem:[%s5 + $0x8] sm:$0xff]
        %v625 = vld [vmem:[%s5 + $0x10] sm:$0xff]
        %v626 = vld [vmem:[%s5 + $0x18] sm:$0xff]
        %v627 = vld [vmem:[%s7] sm:$0x1]
        %v629 = vperm.slane %v627, 0
        %v632 = vsel %vm539, %v530, 0
        %634 = vmatpush.msra.mxu0 0.0
        %635 = vmatpush.msra.mxu0 0.0
        %636 = vmatpush.msra.mxu0 0.0
        %637 = vmatpush.msra.mxu0 0.0
        %638 = vmatpush.msra.mxu0 0.0
        %639 = vmatpush.msra.mxu0 0.0
        %640 = vmatpush.msra.mxu0 0.0
        %641 = vmatpush.msra.mxu0 0.0
        %642 = vmatpush.msra.mxu0 0.0
        %643 = vmatpush.msra.mxu0 0.0
        %644 = vmatpush.msra.mxu0 0.0
        %645 = vmatpush.msra.mxu0 0.0
        %646 = vmatpush.msra.mxu0 %v626
        %647 = vmatpush.msra.mxu0 %v625
        %648 = vmatpush.msra.mxu0 %v624
        %649 = vmatpush.msra.mxu0 %v623
        %650 = vmatmul.f32.gmra.mxu0 %v632
        %v651 = vpop.f32.mrf.mxu0
        %v652 = vadd.f32 %v629, %v651
        %653 = vdwg.mxu0
        %s654 = scalar_lea.vmem %s5, 32
        %v655 = vld [vmem:[%s654] sm:$0xff]
        %v656 = vld [vmem:[%s654 + $0x8] sm:$0xff]
        %v657 = vld [vmem:[%s654 + $0x10] sm:$0xff]
        %v658 = vld [vmem:[%s654 + $0x18] sm:$0xff]
        %s659 = scalar_lea.vmem %s7, 1
        %v660 = vld [vmem:[%s659] sm:$0x1]
        %v662 = vperm.slane %v660, 0
        %664 = vmatpush.msra.mxu0 0.0
        %665 = vmatpush.msra.mxu0 0.0
        %666 = vmatpush.msra.mxu0 0.0
        %667 = vmatpush.msra.mxu0 0.0
        %668 = vmatpush.msra.mxu0 0.0
        %669 = vmatpush.msra.mxu0 0.0
        %670 = vmatpush.msra.mxu0 0.0
        %671 = vmatpush.msra.mxu0 0.0
        %672 = vmatpush.msra.mxu0 0.0
        %673 = vmatpush.msra.mxu0 0.0
        %674 = vmatpush.msra.mxu0 0.0
        %675 = vmatpush.msra.mxu0 0.0
        %676 = vmatpush.msra.mxu0 %v658
        %677 = vmatpush.msra.mxu0 %v657
        %678 = vmatpush.msra.mxu0 %v656
        %679 = vmatpush.msra.mxu0 %v655
        %680 = vmatmul.f32.gmra.mxu0 %v632
        %v681 = vpop.f32.mrf.mxu0
        %v682 = vadd.f32 %v662, %v681
        %683 = vdwg.mxu0
        %s684 = scalar_lea.vmem %s5, 64
        %v685 = vld [vmem:[%s684] sm:$0xff]
        %v686 = vld [vmem:[%s684 + $0x8] sm:$0xff]
        %v687 = vld [vmem:[%s684 + $0x10] sm:$0xff]
        %v688 = vld [vmem:[%s684 + $0x18] sm:$0xff]
        %s689 = scalar_lea.vmem %s7, 2
        %v690 = vld [vmem:[%s689] sm:$0x1]
        %v692 = vperm.slane %v690, 0
        %694 = vmatpush.msra.mxu0 0.0
        %695 = vmatpush.msra.mxu0 0.0
        %696 = vmatpush.msra.mxu0 0.0
        %697 = vmatpush.msra.mxu0 0.0
        %698 = vmatpush.msra.mxu0 0.0
        %699 = vmatpush.msra.mxu0 0.0
        %700 = vmatpush.msra.mxu0 0.0
        %701 = vmatpush.msra.mxu0 0.0
        %702 = vmatpush.msra.mxu0 0.0
        %703 = vmatpush.msra.mxu0 0.0
        %704 = vmatpush.msra.mxu0 0.0
        %705 = vmatpush.msra.mxu0 0.0
        %706 = vmatpush.msra.mxu0 %v688
        %707 = vmatpush.msra.mxu0 %v687
        %708 = vmatpush.msra.mxu0 %v686
        %709 = vmatpush.msra.mxu0 %v685
        %710 = vmatmul.f32.gmra.mxu0 %v632
        %v711 = vpop.f32.mrf.mxu0
        %v712 = vadd.f32 %v692, %v711
        %713 = vdwg.mxu0
        %v714 = vadd.f32 %v561, %v652
        %v715 = vxor.u32 %v714, 2147483648
        %v716 = vmul.f32 %v715, 1.442695
        %v717 = vpow.pop %v716
        %v718 = vadd.f32 %v717, 1.0
        %v719 = vrcp.pop %v718
        %v720 = vmul.f32 %v718, %v719
        %v721 = vsub.f32 1.0, %v720
        %v722 = vmul.f32 %v719, %v721
        %v723 = vadd.f32 %v719, %v722
        %vm724 = vweird.f32 %v718
        %vm725 = vweird.f32 %v719
        %vm726 = vmor %vm724, %vm725
        %v727 = vsel %vm726, %v719, %v723
        %v728 = vand.u32 2147483647, %v718
        %vm729 = vcmp.eq.f32.partialorder %v728, 8.507059e+37
        %v730 = vand.u32 %v718, 2147483648
        %v731 = vor.u32 1.1754944e-38, %v730
        %v732 = vsel %vm729, %v731, %v727
        %v733 = vmul.f32 1.0, %v732
        %v734 = vadd.f32 %v591, %v682
        %v735 = vxor.u32 %v734, 2147483648
        %v736 = vmul.f32 %v735, 1.442695
        %v737 = vpow.pop %v736
        %v738 = vadd.f32 %v737, 1.0
        %v739 = vrcp.pop %v738
        %v740 = vmul.f32 %v738, %v739
        %v741 = vsub.f32 1.0, %v740
        %v742 = vmul.f32 %v739, %v741
        %v743 = vadd.f32 %v739, %v742
        %vm744 = vweird.f32 %v738
        %vm745 = vweird.f32 %v739
        %vm746 = vmor %vm744, %vm745
        %v747 = vsel %vm746, %v739, %v743
        %v748 = vand.u32 2147483647, %v738
        %vm749 = vcmp.eq.f32.partialorder %v748, 8.507059e+37
        %v750 = vand.u32 %v738, 2147483648
        %v751 = vor.u32 1.1754944e-38, %v750
        %v752 = vsel %vm749, %v751, %v747
        %v753 = vmul.f32 1.0, %v752
        %v754 = vmul.f32 %v733, %v712
        %v755 = vadd.f32 %v621, %v754
        %v756 = vtanh.pop %v755
        %v757 = vsub.f32 1.0, %v753
        %v758 = vmul.f32 %v757, %v756
        %v759 = vmul.f32 %v753, %v530
        %v760 = vadd.f32 %v758, %v759
        %vm761 = vcmask 254976
        %762 = vst.msk [vmem:[#allocation2] sm:$0x3] %vm761, %v760
        %v763 = vld [vmem:[%s1] sm:$0x3]
        %v764 = vld [vmem:[%s1 + $0x2] sm:$0x3]
        %v765 = vld [vmem:[%s1 + $0x4] sm:$0x3]
        %v766 = vld [vmem:[%s1 + $0x6] sm:$0x3]
        %v767 = vld [vmem:[%s1 + $0x8] sm:$0x3]
        %v768 = vld [vmem:[%s1 + $0xa] sm:$0x3]
        %v769 = vld [vmem:[%s1 + $0xc] sm:$0x3]
        %v770 = vld [vmem:[%s1 + $0xe] sm:$0x3]
        %v771 = vmul.f32 %v763, %v760
        %v772 = vmul.f32 %v764, %v760
        %v773 = vmul.f32 %v765, %v760
        %v774 = vmul.f32 %v766, %v760
        %v775 = vmul.f32 %v767, %v760
        %v776 = vmul.f32 %v768, %v760
        %v777 = vmul.f32 %v769, %v760
        %v778 = vmul.f32 %v770, %v760
        %v779 = vsel %vm761, %v771, 0.0
        %780 = vadd.xlane.f32.xlu0 %v779
        %v781 = vpop.xlane.xlu0 %780
        %v782 = vsel %vm761, %v772, 0.0
        %783 = vadd.xlane.f32.xlu0 %v782
        %v784 = vpop.xlane.xlu0 %783
        %v785 = vsel %vm761, %v773, 0.0
        %786 = vadd.xlane.f32.xlu0 %v785
        %v787 = vpop.xlane.xlu0 %786
        %v788 = vsel %vm761, %v774, 0.0
        %789 = vadd.xlane.f32.xlu0 %v788
        %v790 = vpop.xlane.xlu0 %789
        %v791 = vsel %vm761, %v775, 0.0
        %792 = vadd.xlane.f32.xlu0 %v791
        %v793 = vpop.xlane.xlu0 %792
        %v794 = vsel %vm761, %v776, 0.0
        %795 = vadd.xlane.f32.xlu0 %v794
        %v796 = vpop.xlane.xlu0 %795
        %v797 = vsel %vm761, %v777, 0.0
        %798 = vadd.xlane.f32.xlu0 %v797
        %v799 = vpop.xlane.xlu0 %798
        %v800 = vsel %vm761, %v778, 0.0
        %801 = vadd.xlane.f32.xlu0 %v800
        %v802 = vpop.xlane.xlu0 %801
        %v803 = vld [vmem:[%s2] sm:$0x3]
        %v804 = vld [vmem:[%s2 + $0x2] sm:$0x3]
        %v805 = vld [vmem:[%s2 + $0x4] sm:$0x3]
        %v806 = vld [vmem:[%s2 + $0x6] sm:$0x3]
        %v807 = vld [vmem:[%s2 + $0x8] sm:$0x3]
        %v808 = vld [vmem:[%s2 + $0xa] sm:$0x3]
        %v809 = vld [vmem:[%s2 + $0xc] sm:$0x3]
        %v810 = vld [vmem:[%s2 + $0xe] sm:$0x3]
        %v811 = vadd.f32 %v781, %v803
        %v812 = vadd.f32 %v784, %v804
        %v813 = vadd.f32 %v787, %v805
        %v814 = vadd.f32 %v790, %v806
        %v815 = vadd.f32 %v793, %v807
        %v816 = vadd.f32 %v796, %v808
        %v817 = vadd.f32 %v799, %v809
        %v818 = vadd.f32 %v802, %v810
        %vm819 = vcmask 1024
        %v820 = vsel %vm819, %v811, -inf
        %v821 = vsel %vm819, %v812, -inf
        %v822 = vsel %vm819, %v813, -inf
        %v823 = vsel %vm819, %v814, -inf
        %v824 = vsel %vm819, %v815, -inf
        %v825 = vmax.f32 %v820, %v824
        %v826 = vsel %vm819, %v816, -inf
        %v827 = vmax.f32 %v821, %v826
        %v828 = vsel %vm819, %v817, -inf
        %v829 = vmax.f32 %v822, %v828
        %v830 = vsel %vm819, %v818, -inf
        %v831 = vmax.f32 %v823, %v830
        %v832 = vmax.f32 %v825, %v827
        %v833 = vmax.f32 %v829, %v831
        %v834 = vmax.f32 %v832, %v833
        %v835 = vsub.f32 %v811, %v834
        %v836 = vsub.f32 %v812, %v834
        %v837 = vsub.f32 %v813, %v834
        %v838 = vsub.f32 %v814, %v834
        %v839 = vsub.f32 %v815, %v834
        %v840 = vsub.f32 %v816, %v834
        %v841 = vsub.f32 %v817, %v834
        %v842 = vsub.f32 %v818, %v834
        %v843 = vmul.f32 %v835, 1.442695
        %v844 = vpow.pop %v843
        %v845 = vmul.f32 %v836, 1.442695
        %v846 = vpow.pop %v845
        %v847 = vmul.f32 %v837, 1.442695
        %v848 = vpow.pop %v847
        %v849 = vmul.f32 %v838, 1.442695
        %v850 = vpow.pop %v849
        %v851 = vmul.f32 %v839, 1.442695
        %v852 = vpow.pop %v851
        %v853 = vmul.f32 %v840, 1.442695
        %v854 = vpow.pop %v853
        %v855 = vmul.f32 %v841, 1.442695
        %v856 = vpow.pop %v855
        %v857 = vmul.f32 %v842, 1.442695
        %v858 = vpow.pop %v857
        %v859 = vsel %vm819, %v844, 0.0
        %v860 = vsel %vm819, %v846, 0.0
        %v861 = vadd.f32 %v859, %v860
        %v862 = vsel %vm819, %v848, 0.0
        %v863 = vadd.f32 %v861, %v862
        %v864 = vsel %vm819, %v850, 0.0
        %v865 = vadd.f32 %v863, %v864
        %v866 = vsel %vm819, %v852, 0.0
        %v867 = vadd.f32 %v865, %v866
        %v868 = vsel %vm819, %v854, 0.0
        %v869 = vadd.f32 %v867, %v868
        %v870 = vsel %vm819, %v856, 0.0
        %v871 = vadd.f32 %v869, %v870
        %v872 = vsel %vm819, %v858, 0.0
        %v873 = vadd.f32 %v871, %v872
        %v874 = vrcp.pop %v873
        %v875 = vmul.f32 %v873, %v874
        %v876 = vsub.f32 1.0, %v875
        %v877 = vmul.f32 %v874, %v876
        %v878 = vadd.f32 %v874, %v877
        %vm879 = vweird.f32 %v873
        %vm880 = vweird.f32 %v874
        %vm881 = vmor %vm879, %vm880
        %v882 = vsel %vm881, %v874, %v878
        %v883 = vand.u32 2147483647, %v873
        %vm884 = vcmp.eq.f32.partialorder %v883, 8.507059e+37
        %v885 = vand.u32 %v873, 2147483648
        %v886 = vor.u32 1.1754944e-38, %v885
        %v887 = vsel %vm884, %v886, %v882
        %v888 = vmul.f32 %v844, %v887
        %v889 = vmul.f32 %v846, %v887
        %v890 = vmul.f32 %v848, %v887
        %v891 = vmul.f32 %v850, %v887
        %v892 = vmul.f32 %v852, %v887
        %v893 = vmul.f32 %v854, %v887
        %v894 = vmul.f32 %v856, %v887
        %v895 = vmul.f32 %v858, %v887
        %897 = vset.pattern.permute.xlu0 0
        %898 = vperm.xlu0 %897, %v888
        %v899 = vpop.permute.xlu0 %898
        %902 = vset.pattern.permute.xlu0 0
        %903 = vperm.xlu0 %902, %v889
        %v904 = vpop.permute.xlu0 %903
        %907 = vset.pattern.permute.xlu0 0
        %908 = vperm.xlu0 %907, %v890
        %v909 = vpop.permute.xlu0 %908
        %912 = vset.pattern.permute.xlu0 0
        %913 = vperm.xlu0 %912, %v891
        %v914 = vpop.permute.xlu0 %913
        %917 = vset.pattern.permute.xlu0 0
        %918 = vperm.xlu0 %917, %v892
        %v919 = vpop.permute.xlu0 %918
        %922 = vset.pattern.permute.xlu0 0
        %923 = vperm.xlu0 %922, %v893
        %v924 = vpop.permute.xlu0 %923
        %927 = vset.pattern.permute.xlu0 0
        %928 = vperm.xlu0 %927, %v894
        %v929 = vpop.permute.xlu0 %928
        %932 = vset.pattern.permute.xlu0 0
        %933 = vperm.xlu0 %932, %v895
        %v934 = vpop.permute.xlu0 %933
        %v936 = vmul.f32 %v899, %v763
        %v937 = vmul.f32 %v904, %v764
        %v938 = vmul.f32 %v909, %v765
        %v939 = vmul.f32 %v914, %v766
        %v940 = vmul.f32 %v919, %v767
        %v941 = vmul.f32 %v924, %v768
        %v942 = vmul.f32 %v929, %v769
        %v943 = vmul.f32 %v934, %v770
        %v944 = vsel %vm761, %v936, 0.0
        %v945 = vsel %vm761, %v937, 0.0
        %v946 = vadd.f32 %v944, %v945
        %v947 = vsel %vm761, %v938, 0.0
        %v948 = vadd.f32 %v946, %v947
        %v949 = vsel %vm761, %v939, 0.0
        %v950 = vadd.f32 %v948, %v949
        %v951 = vsel %vm761, %v940, 0.0
        %v952 = vadd.f32 %v950, %v951
        %v953 = vsel %vm761, %v941, 0.0
        %v954 = vadd.f32 %v952, %v953
        %v955 = vsel %vm761, %v942, 0.0
        %v956 = vadd.f32 %v954, %v955
        %v957 = vsel %vm761, %v943, 0.0
        %v958 = vadd.f32 %v956, %v957
        %v959 = vld [vmem:[%s8] sm:$0xff]
        %v960 = vld [vmem:[%s8 + $0x8] sm:$0xff]
        %v961 = vld [vmem:[%s8 + $0x10] sm:$0xff]
        %v962 = vld [vmem:[%s8 + $0x18] sm:$0xff]
        %v963 = vld [vmem:[%s9] sm:$0xff]
        %v964 = vld [vmem:[%s9 + $0x8] sm:$0xff]
        %v965 = vld [vmem:[%s9 + $0x10] sm:$0xff]
        %v966 = vld [vmem:[%s9 + $0x18] sm:$0xff]
        %v968 = vsel %vm539, %v760, 0
        %970 = vmatpush.msra.mxu0 0.0
        %971 = vmatpush.msra.mxu0 0.0
        %972 = vmatpush.msra.mxu0 0.0
        %973 = vmatpush.msra.mxu0 0.0
        %974 = vmatpush.msra.mxu0 0.0
        %975 = vmatpush.msra.mxu0 0.0
        %976 = vmatpush.msra.mxu0 0.0
        %977 = vmatpush.msra.mxu0 0.0
        %978 = vmatpush.msra.mxu0 0.0
        %979 = vmatpush.msra.mxu0 0.0
        %980 = vmatpush.msra.mxu0 0.0
        %981 = vmatpush.msra.mxu0 0.0
        %982 = vmatpush.msra.mxu0 %v966
        %983 = vmatpush.msra.mxu0 %v965
        %984 = vmatpush.msra.mxu0 %v964
        %985 = vmatpush.msra.mxu0 %v963
        %986 = vmatmul.f32.gmra.mxu0 %v968
        %v987 = vpop.f32.mrf.mxu0
        %v988 = vadd.f32 0.0, %v987
        %989 = vdwg.mxu0
        %v991 = vsel %vm539, %v958, 0
        %993 = vmatpush.msra.mxu0 0.0
        %994 = vmatpush.msra.mxu0 0.0
        %995 = vmatpush.msra.mxu0 0.0
        %996 = vmatpush.msra.mxu0 0.0
        %997 = vmatpush.msra.mxu0 0.0
        %998 = vmatpush.msra.mxu0 0.0
        %999 = vmatpush.msra.mxu0 0.0
        %1000 = vmatpush.msra.mxu0 0.0
        %1001 = vmatpush.msra.mxu0 0.0
        %1002 = vmatpush.msra.mxu0 0.0
        %1003 = vmatpush.msra.mxu0 0.0
        %1004 = vmatpush.msra.mxu0 0.0
        %1005 = vmatpush.msra.mxu0 %v962
        %1006 = vmatpush.msra.mxu0 %v961
        %1007 = vmatpush.msra.mxu0 %v960
        %1008 = vmatpush.msra.mxu0 %v959
        %1009 = vmatmul.f32.gmra.mxu0 %v991
        %v1010 = vpop.f32.mrf.mxu0
        %v1011 = vadd.f32 %v988, %v1010
        %1012 = vdwg.mxu0
        %v1013 = vld [vmem:[%s10] sm:$0x1]
        %v1015 = vperm.slane %v1013, 0
        %v1017 = vadd.f32 %v1011, %v1015
        %v1018 = vtanh.pop %v1017
        %v1019 = vld [vmem:[%s11] sm:$0xff]
        %v1020 = vld [vmem:[%s11 + $0x8] sm:$0xff]
        %v1021 = vld [vmem:[%s11 + $0x10] sm:$0xff]
        %v1022 = vld [vmem:[%s11 + $0x18] sm:$0xff]
        %v1023 = vld [vmem:[%s12] sm:$0x1]
        %v1025 = vperm.slane %v1023, 0
        %v1028 = vsel %vm539, %v1018, 0
        %1030 = vmatpush.msra.mxu0 0.0
        %1031 = vmatpush.msra.mxu0 0.0
        %1032 = vmatpush.msra.mxu0 0.0
        %1033 = vmatpush.msra.mxu0 0.0
        %1034 = vmatpush.msra.mxu0 0.0
        %1035 = vmatpush.msra.mxu0 0.0
        %1036 = vmatpush.msra.mxu0 0.0
        %1037 = vmatpush.msra.mxu0 0.0
        %1038 = vmatpush.msra.mxu0 0.0
        %1039 = vmatpush.msra.mxu0 0.0
        %1040 = vmatpush.msra.mxu0 0.0
        %1041 = vmatpush.msra.mxu0 0.0
        %1042 = vmatpush.msra.mxu0 %v1022
        %1043 = vmatpush.msra.mxu0 %v1021
        %1044 = vmatpush.msra.mxu0 %v1020
        %1045 = vmatpush.msra.mxu0 %v1019
        %1046 = vmatmul.f32.gmra.mxu0 %v1028
        %v1047 = vpop.f32.mrf.mxu0
        %v1048 = vadd.f32 %v1025, %v1047
        %1049 = vdwg.mxu0
        %vm1050 = vcmask 91136
        %v1051 = vsel %vm1050, %v1048, -inf
        %1052 = vmax.xlane.f32.xlu0 %v1051
        %v1053 = vpop.xlane.xlu0 %1052
        %v1054 = vsub.f32 %v1048, %v1053
        %v1055 = vmul.f32 %v1054, 1.442695
        %v1056 = vpow.pop %v1055
        %v1057 = vsel %vm1050, %v1056, 0.0
        %1058 = vadd.xlane.f32.xlu0 %v1057
        %v1059 = vpop.xlane.xlu0 %1058
        %v1060 = vlog2.pop %v1059
        %v1061 = vmul.f32 %v1060, 0.6931472
        %v1062 = vsub.f32 %v1054, %v1061
        %vm1063 = vcmp.eq.f32.partialorder %v1048, %v1053
        %v1064 = vsel %vm1063, %v486, 12.0
        %v1065 = vsel %vm1050, %v1064, inf
        %1066 = vmin.xlane.f32.xlu0 %v1065
        %v1067 = vpop.xlane.xlu0 %1066
        %vm1068 = vcmp.eq.f32.partialorder %v486, %v1067
        %v1069 = vsel %vm1068, 1, 0
        %v1070 = vcvt.s32.f32 %v1069
        %1071 = vst.msk [vmem:[#allocation3] sm:$0x3] %vm1050, %v1070
        %1072 = vst.msk [vmem:[%s478] sm:$0x3] %vm1050, %v1062
        %1073 = vst.msk [vmem:[%s483] sm:$0x3] %vm819, %v888
        %1074 = vst.msk [vmem:[%s483 + $0x2] sm:$0x3] %vm819, %v889
        %1075 = vst.msk [vmem:[%s483 + $0x4] sm:$0x3] %vm819, %v890
        %1076 = vst.msk [vmem:[%s483 + $0x6] sm:$0x3] %vm819, %v891
        %1077 = vst.msk [vmem:[%s483 + $0x8] sm:$0x3] %vm819, %v892
        %1078 = vst.msk [vmem:[%s483 + $0xa] sm:$0x3] %vm819, %v893
        %1079 = vst.msk [vmem:[%s483 + $0xc] sm:$0x3] %vm819, %v894
        %1080 = vst.msk [vmem:[%s483 + $0xe] sm:$0x3] %vm819, %v895
        %1081 = vst.msk [vmem:[#allocation4] sm:$0x3] %vm761, %v760
        %p1082 = scmp.lt.s32.totalorder %s28, 7
        %s1083 = scalar_select %p1082, %s28, 7
        %s1084 = smul.addr %s1083, 2
        %s1085 = scalar_lea.vmem %s13, %s1084
        %p1086 = scmp.lt.s32.totalorder %s28, 7
        %s1087 = scalar_select %p1086, %s28, 7
        %s1088 = smul.addr %s1087, 8
        %s1089 = smul.addr %s1088, 2
        %s1090 = scalar_lea.vmem %s14, %s1089
        // Predicated region
        $region77: #{crnn_attention_forward.7} parent=71 // pred_check
          %p1091 = pneg %p319
        $region78: #{crnn_attention_forward.7} parent=71 // pred_check_branch
          %1093 = sbr.rel (%p1091) target = $region80
        $region79: #{crnn_attention_forward.7} parent=71 // pred_region
          _
        $region80: #{crnn_attention_forward.7} parent=71 // pred_fallthru
          _
        // Predicated region
        $region81: #{crnn_attention_forward.7} parent=71 // pred_check
          %p1094 = pneg %p345
        $region82: #{crnn_attention_forward.7} parent=71 // pred_check_branch
          %1096 = sbr.rel (%p1094) target = $region84
        $region83: #{crnn_attention_forward.7} parent=71 // pred_region
          _
        $region84: #{crnn_attention_forward.7} parent=71 // pred_fallthru
          _
        // Predicated region
        $region85: #{crnn_attention_forward.7} parent=71 // pred_check
          %p1097 = pneg %p366
        $region86: #{crnn_attention_forward.7} parent=71 // pred_check_branch
          %1099 = sbr.rel (%p1097) target = $region88
        $region87: #{crnn_attention_forward.7} parent=71 // pred_region
          %1101 = vsyncadd [#allocation5], 0
          %s1103 = sshll.u32 [#allocation4], 4
          %s1104 = int_to_ptr.vmem [resolvable:$true] %s1103
          %s1105 = sshll.u32 %s15, 4
          %s1106 = int_to_ptr.hbm [resolvable:$true] %s1105
          %1108 = dma.vmem_to_hbm [thread:$0]  %s1104, 32, %s1106, [#allocation5]
        $region88: #{crnn_attention_forward.7} parent=71 // pred_fallthru
          _
        // Predicated region
        $region89: #{crnn_attention_forward.7} parent=71 // pred_check
          %p1109 = pneg %p366
        $region90: #{crnn_attention_forward.7} parent=71 // pred_check_branch
          %1111 = sbr.rel (%p1109) target = $region92
        $region91: #{crnn_attention_forward.7} parent=71 // pred_region
          %1113 = dma.done [#allocation5], 32
        $region92: #{crnn_attention_forward.7} parent=71 // pred_fallthru
          _
      $region72: #{crnn_attention_forward.7} parent=5 // pred_fallthru
        _
      %p1114 = scmp.le.s32.totalorder 2, %s23
      // Predicated region
      $region93: #{crnn_attention_forward.7} parent=5 // pred_check
        %p1115 = pneg %p1114
      $region94: #{crnn_attention_forward.7} parent=5 // pred_check_branch
        %1117 = sbr.rel (%p1115) target = $region96
      $region95: #{crnn_attention_forward.7} parent=5 // pred_region
        %s1118 = ssub.s32 %s23, 2
        // Predicated region
        $region97: #{crnn_attention_forward.7} parent=95 // pred_check
          %p1119 = pneg %p325
        $region98: #{crnn_attention_forward.7} parent=95 // pred_check_branch
          %1121 = sbr.rel (%p1119) target = $region100
        $region99: #{crnn_attention_forward.7} parent=95 // pred_region
          %p1122 = scmp.lt.s32.totalorder %s29, 7
          %s1123 = scalar_select %p1122, %s29, 7
          %s1124 = smul.addr %s1123, 2
          %s1125 = scalar_lea.vmem %s13, %s1124
        $region100: #{crnn_attention_forward.7} parent=95 // pred_fallthru
          _
        // Predicated region
        $region101: #{crnn_attention_forward.7} parent=95 // pred_check
          %p1126 = pneg %p351
        $region102: #{crnn_attention_forward.7} parent=95 // pred_check_branch
          %1128 = sbr.rel (%p1126) target = $region104
        $region103: #{crnn_attention_forward.7} parent=95 // pred_region
          %p1129 = scmp.lt.s32.totalorder %s29, 7
          %s1130 = scalar_select %p1129, %s29, 7
          %s1131 = smul.addr %s1130, 8
          %s1132 = smul.addr %s1131, 2
          %s1133 = scalar_lea.vmem %s14, %s1132
        $region104: #{crnn_attention_forward.7} parent=95 // pred_fallthru
          _
      $region96: #{crnn_attention_forward.7} parent=5 // pred_fallthru
        _
    $region6: #{crnn_attention_forward.7} parent=1 // loop_footer
      %s27 = sadd.s32 1, %s23
    $region7: #{crnn_attention_forward.7} parent=1 // loop_footer_branch
      %22 = sbr.rel target = $region3
    $region8: #{crnn_attention_forward.7} parent=1 // loop_exit
      _
    %1134 = vsyncpa [#allocation5], 1
    %s1135 = scalar_lea.sflag [#allocation5], 1
    %1136 = vsyncpa %s1135, 1

</llo_original>
